<compile_context>
chip_gen: v7x
topology: tpu7x:2x2x1
jax: 0.10.0
libtpu: 0.0.40
codegen_flags: <defaults>
</compile_context>

<pallas_src>
import functools

import jax
import jax.numpy as jnp
from jax import lax
from jax.experimental import pallas as pl
from jax.experimental.pallas import tpu as pltpu


LANE = 128


def _round_up(x, m):
    return (x + m - 1) // m * m


@functools.lru_cache(maxsize=None)
def _tpu_generation():
    try:
        kind = jax.devices()[0].device_kind.lower()
    except Exception:
        return 6
    if "v7" in kind:
        return 7
    if "v6" in kind:
        return 6
    return 5


@functools.lru_cache(maxsize=None)
def _vmem_limit_bytes():
    cap = None
    try:
        cap = int(pltpu.get_tpu_info().vmem_capacity_bytes)
    except Exception:
        cap = None
    if cap is None:
        cap = (64 << 20) if _tpu_generation() >= 7 else (128 << 20)
    # ~5/8 of physical VMEM: ~40 MiB on v7x (64 MiB), ~80 MiB on v5e/v6e (128 MiB).
    return int(min(cap * 5 // 8, 96 << 20))


def _pick_tn(cp):
    # v6e/v7x MXUs are 2x256x256: a 256-wide N tile feeds the full systolic width and
    # halves grid steps / weight DMAs. v5e (4x128x128) keeps 128.
    if _tpu_generation() >= 6 and cp % 256 == 0:
        return 256
    return LANE


def _pick_tk(kp):
    if kp <= 512:
        return kp
    for tk in (512, 256, 128):
        if kp % tk == 0:
            return tk
    return kp


def _pick_tm(mp, n_blocks):
    # Prefer big tiles (less per-grid-step overhead), but keep >= 2 total blocks when
    # possible so the pipeline / both v7x TensorCores have work.
    for tm in (512, 256, 128):
        if mp % tm == 0 and (mp // tm) * n_blocks >= 2:
            return tm
    for tm in (512, 256, 128):
        if mp % tm == 0:
            return tm
    return mp


# ----------------------------- Pallas kernels ------------------------------------
# Grid = (M blocks, N blocks, K blocks); K is the last, "arbitrary" reduction axis.
# BN scale is pre-folded into the weights, so the epilogue is only `+ bias` (+ReLU).

def _finish(acc, b_ref, relu):
    out = acc + b_ref[...]
    if relu:
        out = jnp.maximum(out, 0.0)
    return out


def _gemm_bias_kernel(x_ref, w_ref, b_ref, o_ref, acc_ref, *, relu):
    part = jnp.dot(x_ref[...], w_ref[...], preferred_element_type=jnp.float32)

    @pl.when(pl.program_id(2) == 0)
    def _():
        acc_ref[...] = part

    @pl.when(pl.program_id(2) != 0)
    def _():
        acc_ref[...] = acc_ref[...] + part

    @pl.when(pl.program_id(2) == pl.num_programs(2) - 1)
    def _():
        o_ref[...] = _finish(acc_ref[...], b_ref, relu).astype(o_ref.dtype)


def _gemm_bias_res_kernel(x_ref, w_ref, b_ref, r_ref, o_ref, acc_ref, *, relu):
    part = jnp.dot(x_ref[...], w_ref[...], preferred_element_type=jnp.float32)

    @pl.when(pl.program_id(2) == 0)
    def _():
        acc_ref[...] = part

    @pl.when(pl.program_id(2) != 0)
    def _():
        acc_ref[...] = acc_ref[...] + part

    @pl.when(pl.program_id(2) == pl.num_programs(2) - 1)
    def _():
        acc = acc_ref[...] + r_ref[...].astype(jnp.float32)   # bf16 residual, f32 add
        o_ref[...] = _finish(acc, b_ref, relu).astype(o_ref.dtype)


def _gemm_bias_proj_kernel(x_ref, w_ref, b_ref, xs_ref, w3_ref, o_ref, acc_ref, *, relu):
    part = jnp.dot(x_ref[...], w_ref[...], preferred_element_type=jnp.float32)

    @pl.when(pl.program_id(2) == 0)
    def _():
        acc_ref[...] = part

    @pl.when(pl.program_id(2) != 0)
    def _():
        acc_ref[...] = acc_ref[...] + part

    @pl.when(pl.program_id(2) == pl.num_programs(2) - 1)
    def _():
        # 1x1 projection shortcut (scale-folded weights); its BN bias is pre-summed
        # into b_ref wrapper-side.
        sc = jnp.dot(xs_ref[...], w3_ref[...], preferred_element_type=jnp.float32)
        o_ref[...] = _finish(acc_ref[...] + sc, b_ref, relu).astype(o_ref.dtype)


# ----------------------------- Pallas call wrapper --------------------------------

def fused_conv_gemm(patches, w_mat, scale, bias, *,
                    residual=None, shortcut=None, relu=False,
                    out_dtype=jnp.float32):
    """Conv-as-GEMM + folded-BN affine + optional residual / projection shortcut + ReLU.

    patches:  (M, K)     im2col patches (bf16 or f32)
    w_mat:    (K, Cout)  conv weights as a matrix
    scale:    (Cout,)    gamma / sqrt(var + eps)   (folded into the weights here)
    bias:     (Cout,)    beta - mean * scale
    residual: (M, Cout)  optional identity residual (passed bf16, added in f32)
    shortcut: optional (xs, w3, s3, b3) projection shortcut fused into the same kernel
    """
    M, K = patches.shape
    Kw, Cout = w_mat.shape
    assert K == Kw

    Cp = _round_up(Cout, LANE)          # lane-dense output / weight columns
    TN = _pick_tn(Cp)
    Kp = _round_up(K, LANE)             # lane-dense contraction dim
    TK = _pick_tk(Kp)
    Mp = _round_up(M, LANE)
    nn = Cp // TN
    TM = _pick_tm(Mp, nn)
    if _tpu_generation() >= 7 and (Mp // TM) * nn == 1 and Mp >= 128:
        TM = Mp // 2                    # never leave one v7x TensorCore idle
    nk = Kp // TK

    def pad2(a, rows, cols):
        return jnp.pad(a, ((0, rows - a.shape[0]), (0, cols - a.shape[1])))

    # Fold BN scale into the weights in f32, then cast to bf16 for the MXU.
    w_fold = w_mat.astype(jnp.float32) * scale.astype(jnp.float32)[None, :]
    x_p = pad2(patches.astype(jnp.bfloat16), Mp, Kp)
    w_p = pad2(w_fold.astype(jnp.bfloat16), Kp, Cp)
    b_f = bias.astype(jnp.float32)

    flops = 2 * Mp * Kp * Cp
    bytes_acc = (x_p.size * 2 + w_p.size * 2 + Cp * 4
                 + Mp * Cp * jnp.dtype(out_dtype).itemsize)

    in_specs = [
        pl.BlockSpec((TM, TK), lambda i, j, k: (i, k)),   # patches (K-streamed)
        pl.BlockSpec((TK, TN), lambda i, j, k: (k, j)),   # scale-folded weights
        pl.BlockSpec((1, TN), lambda i, j, k: (0, j)),    # combined bias
    ]

    if shortcut is not None:
        xs, w3, s3, b3 = shortcut
        Cin = xs.shape[1]
        Cin_p = _round_up(Cin, LANE)
        w3_fold = w3.astype(jnp.float32) * s3.astype(jnp.float32)[None, :]
        xs_p = pad2(xs.astype(jnp.bfloat16), Mp, Cin_p)
        w3_p = pad2(w3_fold.astype(jnp.bfloat16), Cin_p, Cp)
        b_f = b_f + b3.astype(jnp.float32)                # BN biases combine additively
        b_p = jnp.pad(b_f, (0, Cp - Cout)).reshape(1, Cp)
        in_specs += [
            pl.BlockSpec((TM, Cin_p), lambda i, j, k: (i, 0)),
            pl.BlockSpec((Cin_p, TN), lambda i, j, k: (0, j)),
        ]
        args = [x_p, w_p, b_p, xs_p, w3_p]
        kernel = functools.partial(_gemm_bias_proj_kernel, relu=relu)
        flops += 2 * Mp * Cin_p * Cp
        bytes_acc += xs_p.size * 2 + w3_p.size * 2
    elif residual is not None:
        r_p = pad2(residual.astype(jnp.bfloat16), Mp, Cp)   # bf16 residual stream
        b_p = jnp.pad(b_f, (0, Cp - Cout)).reshape(1, Cp)
        in_specs.append(pl.BlockSpec((TM, TN), lambda i, j, k: (i, j)))
        args = [x_p, w_p, b_p, r_p]
        kernel = functools.partial(_gemm_bias_res_kernel, relu=relu)
        bytes_acc += r_p.size * 2
    else:
        b_p = jnp.pad(b_f, (0, Cp - Cout)).reshape(1, Cp)
        args = [x_p, w_p, b_p]
        kernel = functools.partial(_gemm_bias_kernel, relu=relu)

    out = pl.pallas_call(
        kernel,
        out_shape=jax.ShapeDtypeStruct((Mp, Cp), out_dtype),
        grid=(Mp // TM, Cp // TN, nk),
        in_specs=in_specs,
        out_specs=pl.BlockSpec((TM, TN), lambda i, j, k: (i, j)),
        scratch_shapes=[pltpu.VMEM((TM, TN), jnp.float32)],   # f32 K-accumulator
        compiler_params=pltpu.CompilerParams(
            dimension_semantics=("parallel", "parallel", "arbitrary"),
            vmem_limit_bytes=_vmem_limit_bytes(),
        ),
        cost_estimate=pl.CostEstimate(
            flops=int(flops), transcendentals=0, bytes_accessed=int(bytes_acc)),
    )(*args)
    return out[:M, :Cout]


# ----------------------------- glue (plain JAX, fused under jit) -------------------

def im2col(x_nhwc, ksize, stride, pad):
    """Extract conv patches: (N, H, W, C) -> (N*Ho*Wo, ksize*ksize*C), tap-major."""
    N, H, W, C = x_nhwc.shape
    Ho = (H + 2 * pad - ksize) // stride + 1
    Wo = (W + 2 * pad - ksize) // stride + 1
    xp = jnp.pad(x_nhwc, ((0, 0), (pad, pad), (pad, pad), (0, 0)))
    cols = []
    for di in range(ksize):
        for dj in range(ksize):
            sl = xp[:, di:, dj:, :][:, ::stride, ::stride, :][:, :Ho, :Wo, :]
            cols.append(sl)
    patches = jnp.stack(cols, axis=3)  # (N, Ho, Wo, k*k, C)
    return patches.reshape(N * Ho * Wo, ksize * ksize * C), Ho, Wo


def torch_w_to_mat(w_oihw):
    """(Cout, Cin, kh, kw) -> (kh*kw*Cin, Cout), matching im2col ordering."""
    cout = w_oihw.shape[0]
    return jnp.transpose(w_oihw, (2, 3, 1, 0)).reshape(-1, cout)


def bn_fold(gamma, beta, mean, var, eps=1e-5):
    scale = gamma / jnp.sqrt(var + eps)
    bias = beta - mean * scale
    return scale, bias


def _block_forward(x_nchw, p, in_channels, out_channels, stride):
    """Pallas implementation of Block.forward (inference-mode BN)."""
    x = jnp.transpose(x_nchw, (0, 2, 3, 1)).astype(jnp.float32)  # NHWC
    N, H, W, Cin = x.shape
    assert Cin == in_channels
    x_bf = x.astype(jnp.bfloat16)  # bf16 feed for the MXU paths

    # conv1 (3x3, stride, pad 1) + bn1 + relu  -> bf16 intermediate
    s1, b1 = bn_fold(p["bn1_gamma"], p["bn1_beta"], p["bn1_mean"], p["bn1_var"])
    patches1, Ho, Wo = im2col(x_bf, 3, stride, 1)
    out1 = fused_conv_gemm(patches1, torch_w_to_mat(p["conv1_w"]), s1, b1,
                           relu=True, out_dtype=jnp.bfloat16)
    out1_img = out1.reshape(N, Ho, Wo, out_channels)

    # conv2 (3x3, stride 1, pad 1) + bn2 + shortcut + relu, all in one kernel call.
    # Final output kept f32 for PyTorch-fidelity validation; use bf16 when chaining blocks.
    s2, b2 = bn_fold(p["bn2_gamma"], p["bn2_beta"], p["bn2_mean"], p["bn2_var"])
    patches2, _, _ = im2col(out1_img, 3, 1, 1)
    w2 = torch_w_to_mat(p["conv2_w"])

    if in_channels != out_channels or stride > 1:
        # projection shortcut: 1x1 conv stride s + bn3, fused into the conv2 kernel.
        s3, b3 = bn_fold(p["bn3_gamma"], p["bn3_beta"], p["bn3_mean"], p["bn3_var"])
        xs = x_bf[:, ::stride, ::stride, :][:, :Ho, :Wo, :]
        xs = xs.reshape(N * Ho * Wo, in_channels)
        w3 = torch_w_to_mat(p["conv3_w"])
        out = fused_conv_gemm(patches2, w2, s2, b2,
                              shortcut=(xs, w3, s3, b3), relu=True)
    else:
        # identity shortcut: bf16 residual added in f32 inside the kernel.
        res = x_bf.reshape(N * H * W, in_channels)
        out = fused_conv_gemm(patches2, w2, s2, b2, residual=res, relu=True)

    out = out.reshape(N, Ho, Wo, out_channels)
    return jnp.transpose(out, (0, 3, 1, 2))  # back to NCHW


block_forward = jax.jit(_block_forward, static_argnums=(2, 3, 4))


# ----------------------------- reference (for validation) -------------------------

def ref_block(x, p, in_c, out_c, stride, eps=1e-5):
    def conv(z, w, s, pad):
        return lax.conv_general_dilated(
            z, w, window_strides=(s, s), padding=((pad, pad), (pad, pad)),
            dimension_numbers=("NCHW", "OIHW", "NCHW"),
            precision=lax.Precision.HIGHEST)

    def bn(z, g, b, m, v):
        g = g.reshape(1, -1, 1, 1); b = b.reshape(1, -1, 1, 1)
        m = m.reshape(1, -1, 1, 1); v = v.reshape(1, -1, 1, 1)
        return (z - m) / jnp.sqrt(v + eps) * g + b

    out1 = jax.nn.relu(bn(conv(x, p["conv1_w"], stride, 1),
                          p["bn1_gamma"], p["bn1_beta"], p["bn1_mean"], p["bn1_var"]))
    out1 = bn(conv(out1, p["conv2_w"], 1, 1),
              p["bn2_gamma"], p["bn2_beta"], p["bn2_mean"], p["bn2_var"])
    if in_c != out_c or stride > 1:
        out2 = bn(conv(x, p["conv3_w"], stride, 0),
                  p["bn3_gamma"], p["bn3_beta"], p["bn3_mean"], p["bn3_var"])
        return jax.nn.relu(out1 + out2)
    return jax.nn.relu(out1 + x)


# ----------------------------- deterministic params -------------------------------

def init_params(key, in_c, out_c):
    ks = jax.random.split(key, 15)
    p = {}
    p["conv1_w"] = 0.1 * jax.random.normal(ks[0], (out_c, in_c, 3, 3), jnp.float32)
    p["conv2_w"] = 0.1 * jax.random.normal(ks[1], (out_c, out_c, 3, 3), jnp.float32)
    p["conv3_w"] = 0.1 * jax.random.normal(ks[2], (out_c, in_c, 1, 1), jnp.float32)
    for i, name in enumerate(("bn1", "bn2", "bn3")):
        base = 3 + 4 * i
        p[f"{name}_gamma"] = 1.0 + 0.1 * jax.random.normal(ks[base + 0], (out_c,), jnp.float32)
        p[f"{name}_beta"] = 0.1 * jax.random.normal(ks[base + 1], (out_c,), jnp.float32)
        p[f"{name}_mean"] = 0.1 * jax.random.normal(ks[base + 2], (out_c,), jnp.float32)
        p[f"{name}_var"] = jax.random.uniform(ks[base + 3], (out_c,), jnp.float32,
                                              minval=0.5, maxval=1.5)
    return p


# ----------------------------- main -----------------------------------------------

if __name__ == "__main__":
    key = jax.random.PRNGKey(0)
    kx, kp1, kp2 = jax.random.split(key, 3)

    x = jax.random.normal(kx, (2, 4, 16, 16), jnp.float32)  # NCHW, like PyTorch

    # bf16 MXU inputs / scale-folded bf16 weights vs the f32 HIGHEST reference.
    ATOL = RTOL = 5e-2

    # Case 1: downsampling block (in_channels != out_channels, stride 2) -> fused conv3 path
    params_a = init_params(kp1, 4, 8)
    out_a = jax.block_until_ready(block_forward(x, params_a, 4, 8, 2))
    ref_a = jax.block_until_ready(ref_block(x, params_a, 4, 8, 2))
    assert out_a.shape == (2, 8, 8, 8), out_a.shape
    assert bool(jnp.all(jnp.isfinite(out_a)))
    assert bool(jnp.allclose(out_a, ref_a, atol=ATOL, rtol=RTOL)), float(
        jnp.max(jnp.abs(out_a - ref_a)))

    # Case 2: identity-shortcut block (in_channels == out_channels, stride 1)
    params_b = init_params(kp2, 4, 4)
    out_b = jax.block_until_ready(block_forward(x, params_b, 4, 4, 1))
    ref_b = jax.block_until_ready(ref_block(x, params_b, 4, 4, 1))
    assert out_b.shape == (2, 4, 16, 16), out_b.shape
    assert bool(jnp.all(jnp.isfinite(out_b)))
    assert bool(jnp.allclose(out_b, ref_b, atol=ATOL, rtol=RTOL)), float(
        jnp.max(jnp.abs(out_b - ref_b)))

    print("KERNEL_OK")
</pallas_src>

<mosaic_0001>
module attributes {stable_mosaic.version = 11 : i64} {
  func.func @_gemm_bias_kernel(%arg0: i32, %arg1: i32, %arg2: i32, %arg3: memref<128x128xbf16, #tpu.memory_space<vmem>>, %arg4: memref<128x128xbf16, #tpu.memory_space<vmem>>, %arg5: memref<1x128xf32, #tpu.memory_space<vmem>>, %arg6: memref<128x128xbf16, #tpu.memory_space<vmem>>, %arg7: memref<128x128xf32, #tpu.memory_space<vmem>>) attributes {dimension_semantics = [#tpu.dimension_semantics<parallel>, #tpu.dimension_semantics<parallel>, #tpu.dimension_semantics<arbitrary>], iteration_bounds = array<i64: 1, 1, 1>, scalar_prefetch = 0 : i64, scratch_operands = 1 : i64, tpu.core_type = #tpu.core_type<tc>, window_params = [{transform_indices = @transform_0, window_bounds = array<i64: 128, 128>}, {transform_indices = @transform_1, window_bounds = array<i64: 128, 128>}, {transform_indices = @transform_2, window_bounds = array<i64: 1, 128>}, {transform_indices = @transform_3, window_bounds = array<i64: 128, 128>}]} {
    %c0 = arith.constant 0 : index
    %c0_0 = arith.constant 0 : index
    %0 = vector.load %arg3[%c0, %c0_0] : memref<128x128xbf16, #tpu.memory_space<vmem>>, vector<128x128xbf16>
    %c0_1 = arith.constant 0 : index
    %c0_2 = arith.constant 0 : index
    %1 = vector.load %arg4[%c0_1, %c0_2] : memref<128x128xbf16, #tpu.memory_space<vmem>>, vector<128x128xbf16>
    %cst = arith.constant dense<0.000000e+00> : vector<128x128xf32>
    %2 = tpu.matmul %0, %1, %cst {dimension_numbers = #tpu.dot_dimension_numbers<[1], [0], [0], [1], [0, 0, 1, 1], [], []>} : vector<128x128xbf16>, vector<128x128xbf16>, vector<128x128xf32> -> vector<128x128xf32>
    %c0_i32 = arith.constant 0 : i32
    %3 = arith.cmpi eq, %arg2, %c0_i32 : i32
    %4 = arith.extui %3 : i1 to i32
    %c0_i32_3 = arith.constant 0 : i32
    %5 = arith.cmpi ne, %4, %c0_i32_3 : i32
    scf.if %5 {
      %c0_8 = arith.constant 0 : index
      %c0_9 = arith.constant 0 : index
      %12 = vector.load %arg7[%c0_8, %c0_9] : memref<128x128xf32, #tpu.memory_space<vmem>>, vector<128x128xf32>
      tpu.vector_store %arg7[%c0_8, %c0_9], %2 {strides = array<i32>} : memref<128x128xf32, #tpu.memory_space<vmem>>, vector<128x128xf32>,
    } else {
    }
    %c0_i32_4 = arith.constant 0 : i32
    %6 = arith.cmpi ne, %arg2, %c0_i32_4 : i32
    %7 = arith.extui %6 : i1 to i32
    %c0_i32_5 = arith.constant 0 : i32
    %8 = arith.cmpi ne, %7, %c0_i32_5 : i32
    scf.if %8 {
      %c0_8 = arith.constant 0 : index
      %c0_9 = arith.constant 0 : index
      %12 = vector.load %arg7[%c0_8, %c0_9] : memref<128x128xf32, #tpu.memory_space<vmem>>, vector<128x128xf32>
      %13 = arith.addf %12, %2 : vector<128x128xf32>
      %c0_10 = arith.constant 0 : index
      %c0_11 = arith.constant 0 : index
      %14 = vector.load %arg7[%c0_10, %c0_11] : memref<128x128xf32, #tpu.memory_space<vmem>>, vector<128x128xf32>
      tpu.vector_store %arg7[%c0_10, %c0_11], %13 {strides = array<i32>} : memref<128x128xf32, #tpu.memory_space<vmem>>, vector<128x128xf32>,
    } else {
    }
    %c0_i32_6 = arith.constant 0 : i32
    %9 = arith.cmpi eq, %arg2, %c0_i32_6 : i32
    %10 = arith.extui %9 : i1 to i32
    %c0_i32_7 = arith.constant 0 : i32
    %11 = arith.cmpi ne, %10, %c0_i32_7 : i32
    scf.if %11 {
      %c0_8 = arith.constant 0 : index
      %c0_9 = arith.constant 0 : index
      %12 = vector.load %arg7[%c0_8, %c0_9] : memref<128x128xf32, #tpu.memory_space<vmem>>, vector<128x128xf32>
      %c0_10 = arith.constant 0 : index
      %c0_11 = arith.constant 0 : index
      %13 = vector.load %arg5[%c0_10, %c0_11] : memref<1x128xf32, #tpu.memory_space<vmem>>, vector<1x128xf32>
      %14 = vector.broadcast %13 : vector<1x128xf32> to vector<128x128xf32>
      %15 = arith.addf %12, %14 : vector<128x128xf32>
      %cst_12 = arith.constant 0.000000e+00 : f32
      %16 = vector.broadcast %cst_12 : f32 to vector<128x128xf32>
      %17 = arith.maximumf %15, %16 : vector<128x128xf32>
      %18 = arith.truncf %17 : vector<128x128xf32> to vector<128x128xbf16>
      %c0_13 = arith.constant 0 : index
      %c0_14 = arith.constant 0 : index
      %19 = vector.load %arg6[%c0_13, %c0_14] : memref<128x128xbf16, #tpu.memory_space<vmem>>, vector<128x128xbf16>
      tpu.vector_store %arg6[%c0_13, %c0_14], %18 {strides = array<i32>} : memref<128x128xbf16, #tpu.memory_space<vmem>>, vector<128x128xbf16>,
    } else {
    }
    return
  }
  func.func @transform_0(%arg0: i32, %arg1: i32, %arg2: i32) -> (i32, i32) {
    %c0_i32 = arith.constant 0 : i32
    return %arg0, %arg2 : i32, i32
  }
  func.func @transform_1(%arg0: i32, %arg1: i32, %arg2: i32) -> (i32, i32) {
    %c0_i32 = arith.constant 0 : i32
    return %arg2, %arg1 : i32, i32
  }
  func.func @transform_2(%arg0: i32, %arg1: i32, %arg2: i32) -> (i32, i32) {
    %c0_i32 = arith.constant 0 : i32
    %c0_i32_0 = arith.constant 0 : i32
    return %c0_i32, %arg1 : i32, i32
  }
  func.func @transform_3(%arg0: i32, %arg1: i32, %arg2: i32) -> (i32, i32) {
    %c0_i32 = arith.constant 0 : i32
    return %arg0, %arg1 : i32, i32
  }
}

module attributes {stable_mosaic.version = 11 : i64} {
  func.func @_gemm_bias_proj_kernel(%arg0: i32, %arg1: i32, %arg2: i32, %arg3: memref<128x128xbf16, #tpu.memory_space<vmem>>, %arg4: memref<128x128xbf16, #tpu.memory_space<vmem>>, %arg5: memref<1x128xf32, #tpu.memory_space<vmem>>, %arg6: memref<128x128xbf16, #tpu.memory_space<vmem>>, %arg7: memref<128x128xbf16, #tpu.memory_space<vmem>>, %arg8: memref<128x128xf32, #tpu.memory_space<vmem>>, %arg9: memref<128x128xf32, #tpu.memory_space<vmem>>) attributes {dimension_semantics = [#tpu.dimension_semantics<parallel>, #tpu.dimension_semantics<parallel>, #tpu.dimension_semantics<arbitrary>], iteration_bounds = array<i64: 1, 1, 1>, scalar_prefetch = 0 : i64, scratch_operands = 1 : i64, tpu.core_type = #tpu.core_type<tc>, window_params = [{transform_indices = @transform_0, window_bounds = array<i64: 128, 128>}, {transform_indices = @transform_1, window_bounds = array<i64: 128, 128>}, {transform_indices = @transform_2, window_bounds = array<i64: 1, 128>}, {transform_indices = @transform_3, window_bounds = array<i64: 128, 128>}, {transform_indices = @transform_4, window_bounds = array<i64: 128, 128>}, {transform_indices = @transform_5, window_bounds = array<i64: 128, 128>}]} {
    %c0 = arith.constant 0 : index
    %c0_0 = arith.constant 0 : index
    %0 = vector.load %arg3[%c0, %c0_0] : memref<128x128xbf16, #tpu.memory_space<vmem>>, vector<128x128xbf16>
    %c0_1 = arith.constant 0 : index
    %c0_2 = arith.constant 0 : index
    %1 = vector.load %arg4[%c0_1, %c0_2] : memref<128x128xbf16, #tpu.memory_space<vmem>>, vector<128x128xbf16>
    %cst = arith.constant dense<0.000000e+00> : vector<128x128xf32>
    %2 = tpu.matmul %0, %1, %cst {dimension_numbers = #tpu.dot_dimension_numbers<[1], [0], [0], [1], [0, 0, 1, 1], [], []>} : vector<128x128xbf16>, vector<128x128xbf16>, vector<128x128xf32> -> vector<128x128xf32>
    %c0_i32 = arith.constant 0 : i32
    %3 = arith.cmpi eq, %arg2, %c0_i32 : i32
    %4 = arith.extui %3 : i1 to i32
    %c0_i32_3 = arith.constant 0 : i32
    %5 = arith.cmpi ne, %4, %c0_i32_3 : i32
    scf.if %5 {
      %c0_8 = arith.constant 0 : index
      %c0_9 = arith.constant 0 : index
      %12 = vector.load %arg9[%c0_8, %c0_9] : memref<128x128xf32, #tpu.memory_space<vmem>>, vector<128x128xf32>
      tpu.vector_store %arg9[%c0_8, %c0_9], %2 {strides = array<i32>} : memref<128x128xf32, #tpu.memory_space<vmem>>, vector<128x128xf32>,
    } else {
    }
    %c0_i32_4 = arith.constant 0 : i32
    %6 = arith.cmpi ne, %arg2, %c0_i32_4 : i32
    %7 = arith.extui %6 : i1 to i32
    %c0_i32_5 = arith.constant 0 : i32
    %8 = arith.cmpi ne, %7, %c0_i32_5 : i32
    scf.if %8 {
      %c0_8 = arith.constant 0 : index
      %c0_9 = arith.constant 0 : index
      %12 = vector.load %arg9[%c0_8, %c0_9] : memref<128x128xf32, #tpu.memory_space<vmem>>, vector<128x128xf32>
      %13 = arith.addf %12, %2 : vector<128x128xf32>
      %c0_10 = arith.constant 0 : index
      %c0_11 = arith.constant 0 : index
      %14 = vector.load %arg9[%c0_10, %c0_11] : memref<128x128xf32, #tpu.memory_space<vmem>>, vector<128x128xf32>
      tpu.vector_store %arg9[%c0_10, %c0_11], %13 {strides = array<i32>} : memref<128x128xf32, #tpu.memory_space<vmem>>, vector<128x128xf32>,
    } else {
    }
    %c0_i32_6 = arith.constant 0 : i32
    %9 = arith.cmpi eq, %arg2, %c0_i32_6 : i32
    %10 = arith.extui %9 : i1 to i32
    %c0_i32_7 = arith.constant 0 : i32
    %11 = arith.cmpi ne, %10, %c0_i32_7 : i32
    scf.if %11 {
      %c0_8 = arith.constant 0 : index
      %c0_9 = arith.constant 0 : index
      %12 = vector.load %arg6[%c0_8, %c0_9] : memref<128x128xbf16, #tpu.memory_space<vmem>>, vector<128x128xbf16>
      %c0_10 = arith.constant 0 : index
      %c0_11 = arith.constant 0 : index
      %13 = vector.load %arg7[%c0_10, %c0_11] : memref<128x128xbf16, #tpu.memory_space<vmem>>, vector<128x128xbf16>
      %cst_12 = arith.constant dense<0.000000e+00> : vector<128x128xf32>
      %14 = tpu.matmul %12, %13, %cst_12 {dimension_numbers = #tpu.dot_dimension_numbers<[1], [0], [0], [1], [0, 0, 1, 1], [], []>} : vector<128x128xbf16>, vector<128x128xbf16>, vector<128x128xf32> -> vector<128x128xf32>
      %c0_13 = arith.constant 0 : index
      %c0_14 = arith.constant 0 : index
      %15 = vector.load %arg9[%c0_13, %c0_14] : memref<128x128xf32, #tpu.memory_space<vmem>>, vector<128x128xf32>
      %16 = arith.addf %15, %14 : vector<128x128xf32>
      %c0_15 = arith.constant 0 : index
      %c0_16 = arith.constant 0 : index
      %17 = vector.load %arg5[%c0_15, %c0_16] : memref<1x128xf32, #tpu.memory_space<vmem>>, vector<1x128xf32>
      %18 = vector.broadcast %17 : vector<1x128xf32> to vector<128x128xf32>
      %19 = arith.addf %16, %18 : vector<128x128xf32>
      %cst_17 = arith.constant 0.000000e+00 : f32
      %20 = vector.broadcast %cst_17 : f32 to vector<128x128xf32>
      %21 = arith.maximumf %19, %20 : vector<128x128xf32>
      %c0_18 = arith.constant 0 : index
      %c0_19 = arith.constant 0 : index
      %22 = vector.load %arg8[%c0_18, %c0_19] : memref<128x128xf32, #tpu.memory_space<vmem>>, vector<128x128xf32>
      tpu.vector_store %arg8[%c0_18, %c0_19], %21 {strides = array<i32>} : memref<128x128xf32, #tpu.memory_space<vmem>>, vector<128x128xf32>,
    } else {
    }
    return
  }
  func.func @transform_0(%arg0: i32, %arg1: i32, %arg2: i32) -> (i32, i32) {
    %c0_i32 = arith.constant 0 : i32
    return %arg0, %arg2 : i32, i32
  }
  func.func @transform_1(%arg0: i32, %arg1: i32, %arg2: i32) -> (i32, i32) {
    %c0_i32 = arith.constant 0 : i32
    return %arg2, %arg1 : i32, i32
  }
  func.func @transform_2(%arg0: i32, %arg1: i32, %arg2: i32) -> (i32, i32) {
    %c0_i32 = arith.constant 0 : i32
    %c0_i32_0 = arith.constant 0 : i32
    return %c0_i32, %arg1 : i32, i32
  }
  func.func @transform_3(%arg0: i32, %arg1: i32, %arg2: i32) -> (i32, i32) {
    %c0_i32 = arith.constant 0 : i32
    %c0_i32_0 = arith.constant 0 : i32
    return %arg0, %c0_i32 : i32, i32
  }
  func.func @transform_4(%arg0: i32, %arg1: i32, %arg2: i32) -> (i32, i32) {
    %c0_i32 = arith.constant 0 : i32
    %c0_i32_0 = arith.constant 0 : i32
    return %c0_i32, %arg1 : i32, i32
  }
  func.func @transform_5(%arg0: i32, %arg1: i32, %arg2: i32) -> (i32, i32) {
    %c0_i32 = arith.constant 0 : i32
    return %arg0, %arg1 : i32, i32
  }
}

</mosaic_0001>

<llo_original>
// kernel: _block_forward.2
$region0: #{_block_forward.2}
  #allocation0 [shape = 'u32[]', space=smem, size = 0x4, offset = 0x4, fixed_abs, tag = 'smem constant byte address 0x4 - core index']
  #allocation1 [shape = 'u32[144,128]{1,0:T(1,128)}', space=vmem, size = 0x12000, scoped, tag = 'internal scratch']
  #allocation2 [shape = 'f32[128,128]{1,0:T(8,128)}', space=vmem, size = 0x10000, scoped, tag = 'scratch operand']
  %s0 = inlined_call_operand.hbm [shape: bf16[128,128], index: 0, kind: input, shape index: {}]
  %s1 = inlined_call_operand.hbm [shape: bf16[128,128], index: 1, kind: input, shape index: {}]
  %s2 = inlined_call_operand.hbm [shape: f32[1,128], index: 2, kind: input, shape index: {}]
  %s3 = inlined_call_operand.hbm [shape: bf16[128,128], index: 3, kind: output, shape index: {}]
  %s4 = sld [smem:[#allocation0]]
  $region46: #{_block_forward.2} parent=0
    _
  %s6 = ssub.s32 1, %s4
  %s7 = scalar_select 0, %s6, %s4
  $region1: #{_block_forward.2} parent=0
    #allocation3 [shape = 'u8[32768]{0}', space=vmem, size = 0x8000, scoped, tag = 'input window, operand 0, single buffered']
    #allocation4 [shape = 's32[1]{0}', space=sflag, size = 0x4, scoped, tag = 'scoped memory for _block_forward.2']
    #allocation5 [shape = 's32[1]{0}', space=sflag, size = 0x4, scoped, tag = 'scoped memory for _block_forward.2']
    #allocation6 [shape = 'u8[32768]{0}', space=vmem, size = 0x8000, scoped, tag = 'input window, operand 1, single buffered']
    #allocation7 [shape = 's32[1]{0}', space=sflag, size = 0x4, scoped, tag = 'scoped memory for _block_forward.2']
    #allocation8 [shape = 'u8[512]{0}', space=vmem, size = 0x400, scoped, tag = 'input window, operand 2, single buffered']
    #allocation9 [shape = 'u8[32768]{0}', space=vmem, size = 0x8000, scoped, tag = 'output window, operand 0, single buffered']
    %8 = vsyncpa [#allocation4], 0
    %9 = vsyncpa [#allocation7], 0
    %10 = vsyncpa [#allocation5], 0
    // Predicated region
    $region2: #{_block_forward.2} parent=1 // pred_check
      _
    $region3: #{_block_forward.2} parent=1 // pred_check_branch
      %12 = sbr.rel (0) target = $region5
    $region4: #{_block_forward.2} parent=1 // pred_region
      %s14 = ssub.s32 1024, 1024
      %15 = vsyncadd [#allocation4], %s14
      %s16 = sshll.u32 [#allocation3], 4
      %s17 = int_to_ptr.vmem [resolvable:$true] %s16
      %22 = dma.hbm_to_vmem [thread:$0]  %s0, 1024, %s17, [#allocation4], 64, 64, 4
    $region5: #{_block_forward.2} parent=1 // pred_fallthru
      _
    // Predicated region
    $region6: #{_block_forward.2} parent=1 // pred_check
      _
    $region7: #{_block_forward.2} parent=1 // pred_check_branch
      %24 = sbr.rel (0) target = $region9
    $region8: #{_block_forward.2} parent=1 // pred_region
      %s26 = ssub.s32 1024, 1024
      %27 = vsyncadd [#allocation7], %s26
      %s28 = sshll.u32 [#allocation6], 4
      %s29 = int_to_ptr.vmem [resolvable:$true] %s28
      %34 = dma.hbm_to_vmem [thread:$0]  %s1, 1024, %s29, [#allocation7], 64, 64, 4
    $region9: #{_block_forward.2} parent=1 // pred_fallthru
      _
    // Predicated region
    $region10: #{_block_forward.2} parent=1 // pred_check
      _
    $region11: #{_block_forward.2} parent=1 // pred_check_branch
      %36 = sbr.rel (0) target = $region13
    $region12: #{_block_forward.2} parent=1 // pred_region
      %s38 = ssub.s32 16, 16
      %39 = vsyncadd [#allocation7], %s38
      %s41 = sshll.u32 [#allocation8], 4
      %s42 = int_to_ptr.vmem [resolvable:$true] %s41
      %44 = dma.hbm_to_vmem [thread:$0]  %s2, 16, %s42, [#allocation7]
    $region13: #{_block_forward.2} parent=1 // pred_fallthru
      _
    // Predicated region
    $region14: #{_block_forward.2} parent=1 // pred_check
      _
    $region15: #{_block_forward.2} parent=1 // pred_check_branch
      %46 = sbr.rel (0) target = $region17
    $region16: #{_block_forward.2} parent=1 // pred_region
      %47 = dma.done [#allocation4], 1024
    $region17: #{_block_forward.2} parent=1 // pred_fallthru
      _
    // Predicated region
    $region18: #{_block_forward.2} parent=1 // pred_check
      _
    $region19: #{_block_forward.2} parent=1 // pred_check_branch
      %49 = sbr.rel (0) target = $region21
    $region20: #{_block_forward.2} parent=1 // pred_region
      %50 = dma.done [#allocation7], 1024
    $region21: #{_block_forward.2} parent=1 // pred_fallthru
      _
    // Predicated region
    $region22: #{_block_forward.2} parent=1 // pred_check
      _
    $region23: #{_block_forward.2} parent=1 // pred_check_branch
      %52 = sbr.rel (0) target = $region25
    $region24: #{_block_forward.2} parent=1 // pred_region
      %53 = dma.done [#allocation7], 16
    $region25: #{_block_forward.2} parent=1 // pred_fallthru
      _
    %v55 = vld [vmem:[#allocation3] sm:$0xf]
    %v56 = vld [vmem:[#allocation3 + $0x4] sm:$0xf]
    %v57 = vld [vmem:[#allocation3 + $0x8] sm:$0xf]
    %v58 = vld [vmem:[#allocation3 + $0xc] sm:$0xf]
    %v59 = vld [vmem:[#allocation3 + $0x10] sm:$0xf]
    %v60 = vld [vmem:[#allocation3 + $0x14] sm:$0xf]
    %v61 = vld [vmem:[#allocation3 + $0x18] sm:$0xf]
    %v62 = vld [vmem:[#allocation3 + $0x1c] sm:$0xf]
    %v63 = vld [vmem:[#allocation3 + $0x20] sm:$0xf]
    %v64 = vld [vmem:[#allocation3 + $0x24] sm:$0xf]
    %v65 = vld [vmem:[#allocation3 + $0x28] sm:$0xf]
    %v66 = vld [vmem:[#allocation3 + $0x2c] sm:$0xf]
    %v67 = vld [vmem:[#allocation3 + $0x30] sm:$0xf]
    %v68 = vld [vmem:[#allocation3 + $0x34] sm:$0xf]
    %v69 = vld [vmem:[#allocation3 + $0x38] sm:$0xf]
    %v70 = vld [vmem:[#allocation3 + $0x3c] sm:$0xf]
    %v71 = vld [vmem:[#allocation6] sm:$0xf]
    %v72 = vld [vmem:[#allocation6 + $0x4] sm:$0xf]
    %v73 = vld [vmem:[#allocation6 + $0x8] sm:$0xf]
    %v74 = vld [vmem:[#allocation6 + $0xc] sm:$0xf]
    %v75 = vld [vmem:[#allocation6 + $0x10] sm:$0xf]
    %v76 = vld [vmem:[#allocation6 + $0x14] sm:$0xf]
    %v77 = vld [vmem:[#allocation6 + $0x18] sm:$0xf]
    %v78 = vld [vmem:[#allocation6 + $0x1c] sm:$0xf]
    %v79 = vld [vmem:[#allocation6 + $0x20] sm:$0xf]
    %v80 = vld [vmem:[#allocation6 + $0x24] sm:$0xf]
    %v81 = vld [vmem:[#allocation6 + $0x28] sm:$0xf]
    %v82 = vld [vmem:[#allocation6 + $0x2c] sm:$0xf]
    %v83 = vld [vmem:[#allocation6 + $0x30] sm:$0xf]
    %v84 = vld [vmem:[#allocation6 + $0x34] sm:$0xf]
    %v85 = vld [vmem:[#allocation6 + $0x38] sm:$0xf]
    %v86 = vld [vmem:[#allocation6 + $0x3c] sm:$0xf]
    %v103 = vunpack.c.l.b16 %v55
    %v104 = vunpack.c.l.b16 %v56
    %v105 = vunpack.c.l.b16 %v57
    %v106 = vunpack.c.l.b16 %v58
    %v107 = vunpack.c.l.b16 %v59
    %v108 = vunpack.c.l.b16 %v60
    %v109 = vunpack.c.l.b16 %v61
    %v110 = vunpack.c.l.b16 %v62
    %v111 = vunpack.c.l.b16 %v63
    %v112 = vunpack.c.l.b16 %v64
    %v113 = vunpack.c.l.b16 %v65
    %v114 = vunpack.c.l.b16 %v66
    %v115 = vunpack.c.l.b16 %v67
    %v116 = vunpack.c.l.b16 %v68
    %v117 = vunpack.c.l.b16 %v69
    %v118 = vunpack.c.l.b16 %v70
    %v119 = vpack.c.b16 %v104, %v103
    %v120 = vpack.c.b16 %v106, %v105
    %v121 = vpack.c.b16 %v108, %v107
    %v122 = vpack.c.b16 %v110, %v109
    %v123 = vpack.c.b16 %v112, %v111
    %v124 = vpack.c.b16 %v114, %v113
    %v125 = vpack.c.b16 %v116, %v115
    %v126 = vpack.c.b16 %v118, %v117
    %v151 = vunpack.c.l.b16 %v71
    %v152 = vunpack.c.l.b16 %v72
    %v153 = vunpack.c.l.b16 %v73
    %v154 = vunpack.c.l.b16 %v74
    %v155 = vunpack.c.l.b16 %v75
    %v156 = vunpack.c.l.b16 %v76
    %v157 = vunpack.c.l.b16 %v77
    %v158 = vunpack.c.l.b16 %v78
    %v159 = vunpack.c.l.b16 %v79
    %v160 = vunpack.c.l.b16 %v80
    %v161 = vunpack.c.l.b16 %v81
    %v162 = vunpack.c.l.b16 %v82
    %v163 = vunpack.c.l.b16 %v83
    %v164 = vunpack.c.l.b16 %v84
    %v165 = vunpack.c.l.b16 %v85
    %v166 = vunpack.c.l.b16 %v86
    %v167 = vpack.c.b16 %v152, %v151
    %v168 = vpack.c.b16 %v154, %v153
    %v169 = vpack.c.b16 %v156, %v155
    %v170 = vpack.c.b16 %v158, %v157
    %v171 = vpack.c.b16 %v160, %v159
    %v172 = vpack.c.b16 %v162, %v161
    %v173 = vpack.c.b16 %v164, %v163
    %v174 = vpack.c.b16 %v166, %v165
    %183 = vmatprep.subr.bf16.mxu0 0
    %184 = vmatpush1.bf16.msra.mxu0 %v167
    %185 = vmatprep.subr.bf16.mxu0 0
    %186 = vmatpush1.bf16.msra.mxu0 %v168
    %187 = vmatprep.subr.bf16.mxu0 0
    %188 = vmatpush1.bf16.msra.mxu0 %v169
    %189 = vmatprep.subr.bf16.mxu0 0
    %190 = vmatpush1.bf16.msra.mxu0 %v170
    %191 = vmatprep.subr.bf16.mxu0 0
    %192 = vmatpush1.bf16.msra.mxu0 %v171
    %193 = vmatprep.subr.bf16.mxu0 0
    %194 = vmatpush1.bf16.msra.mxu0 %v172
    %195 = vmatprep.subr.bf16.mxu0 0
    %196 = vmatpush1.bf16.msra.mxu0 %v173
    %197 = vmatprep.subr.bf16.mxu0 0
    %198 = vmatpush1.bf16.msra.mxu0 %v174
    %199 = vmatprep.subr.bf16.mxu0 0
    %200 = vmatpush1.bf16.msra.mxu0 0
    %201 = vmatprep.subr.bf16.mxu0 0
    %202 = vmatpush1.bf16.msra.mxu0 0
    %203 = vmatprep.subr.bf16.mxu0 0
    %204 = vmatpush1.bf16.msra.mxu0 0
    %205 = vmatprep.subr.bf16.mxu0 0
    %206 = vmatpush1.bf16.msra.mxu0 0
    %207 = vmatprep.subr.bf16.mxu0 0
    %208 = vmatpush1.bf16.msra.mxu0 0
    %209 = vmatprep.subr.bf16.mxu0 0
    %210 = vmatpush1.bf16.msra.mxu0 0
    %211 = vmatprep.subr.bf16.mxu0 0
    %212 = vmatpush1.bf16.msra.mxu0 0
    %213 = vmatprep.subr.bf16.mxu0 0
    %214 = vmatpush1.bf16.msra.mxu0 0
    %215 = vmatprep.mubr.bf16.mxu0 0
    %216 = vmatmul.mubr.bf16.gmra.mrb[0].mxu0 %v119
    %v217 = vpop.f32.mrb[0].mxu0
    %v218 = vadd.f32 0.0, %v217
    %v219 = vpop.f32.mrb[0].mxu0
    %v220 = vpop.f32.mrb[0].mxu0
    %v221 = vadd.f32 0.0, %v220
    %v222 = vpop.f32.mrb[0].mxu0
    %223 = vmatprep.mubr.bf16.mxu0 0
    %224 = vmatmul.mubr.bf16.gmra.mrb[0].mxu0 %v120
    %v225 = vpop.f32.mrb[0].mxu0
    %v226 = vadd.f32 0.0, %v225
    %v227 = vpop.f32.mrb[0].mxu0
    %v228 = vpop.f32.mrb[0].mxu0
    %v229 = vadd.f32 0.0, %v228
    %v230 = vpop.f32.mrb[0].mxu0
    %231 = vmatprep.mubr.bf16.mxu0 0
    %232 = vmatmul.mubr.bf16.gmra.mrb[0].mxu0 %v121
    %v233 = vpop.f32.mrb[0].mxu0
    %v234 = vadd.f32 0.0, %v233
    %v235 = vpop.f32.mrb[0].mxu0
    %v236 = vpop.f32.mrb[0].mxu0
    %v237 = vadd.f32 0.0, %v236
    %v238 = vpop.f32.mrb[0].mxu0
    %239 = vmatprep.mubr.bf16.mxu0 0
    %240 = vmatmul.mubr.bf16.gmra.mrb[0].mxu0 %v122
    %v241 = vpop.f32.mrb[0].mxu0
    %v242 = vadd.f32 0.0, %v241
    %v243 = vpop.f32.mrb[0].mxu0
    %v244 = vpop.f32.mrb[0].mxu0
    %v245 = vadd.f32 0.0, %v244
    %v246 = vpop.f32.mrb[0].mxu0
    %247 = vmatprep.mubr.bf16.mxu0 0
    %248 = vmatmul.mubr.bf16.gmra.mrb[0].mxu0 %v123
    %v249 = vpop.f32.mrb[0].mxu0
    %v250 = vadd.f32 0.0, %v249
    %v251 = vpop.f32.mrb[0].mxu0
    %v252 = vpop.f32.mrb[0].mxu0
    %v253 = vadd.f32 0.0, %v252
    %v254 = vpop.f32.mrb[0].mxu0
    %255 = vmatprep.mubr.bf16.mxu0 0
    %256 = vmatmul.mubr.bf16.gmra.mrb[0].mxu0 %v124
    %v257 = vpop.f32.mrb[0].mxu0
    %v258 = vadd.f32 0.0, %v257
    %v259 = vpop.f32.mrb[0].mxu0
    %v260 = vpop.f32.mrb[0].mxu0
    %v261 = vadd.f32 0.0, %v260
    %v262 = vpop.f32.mrb[0].mxu0
    %263 = vmatprep.mubr.bf16.mxu0 0
    %264 = vmatmul.mubr.bf16.gmra.mrb[0].mxu0 %v125
    %v265 = vpop.f32.mrb[0].mxu0
    %v266 = vadd.f32 0.0, %v265
    %v267 = vpop.f32.mrb[0].mxu0
    %v268 = vpop.f32.mrb[0].mxu0
    %v269 = vadd.f32 0.0, %v268
    %v270 = vpop.f32.mrb[0].mxu0
    %271 = vmatprep.mubr.bf16.mxu0 0
    %272 = vmatmul.mubr.bf16.gmra.mrb[0].mxu0 %v126
    %v273 = vpop.f32.mrb[0].mxu0
    %v274 = vadd.f32 0.0, %v273
    %v275 = vpop.f32.mrb[0].mxu0
    %v276 = vpop.f32.mrb[0].mxu0
    %v277 = vadd.f32 0.0, %v276
    %v278 = vpop.f32.mrb[0].mxu0
    %279 = vdwg.mxu0
    %p280 = scmp.eq.s32.totalorder 0, 0
    // Predicated region
    $region26: #{_block_forward.2} parent=1 // pred_check
      %p281 = pneg %p280
    $region27: #{_block_forward.2} parent=1 // pred_check_branch
      %283 = sbr.rel (%p281) target = $region29
    $region28: #{_block_forward.2} parent=1 // pred_region
      %284 = vst [vmem:[#allocation2] sm:$0xff] %v218
      %285 = vst [vmem:[#allocation2 + $0x8] sm:$0xff] %v221
      %286 = vst [vmem:[#allocation2 + $0x10] sm:$0xff] %v226
      %287 = vst [vmem:[#allocation2 + $0x18] sm:$0xff] %v229
      %288 = vst [vmem:[#allocation2 + $0x20] sm:$0xff] %v234
      %289 = vst [vmem:[#allocation2 + $0x28] sm:$0xff] %v237
      %290 = vst [vmem:[#allocation2 + $0x30] sm:$0xff] %v242
      %291 = vst [vmem:[#allocation2 + $0x38] sm:$0xff] %v245
      %292 = vst [vmem:[#allocation2 + $0x40] sm:$0xff] %v250
      %293 = vst [vmem:[#allocation2 + $0x48] sm:$0xff] %v253
      %294 = vst [vmem:[#allocation2 + $0x50] sm:$0xff] %v258
      %295 = vst [vmem:[#allocation2 + $0x58] sm:$0xff] %v261
      %296 = vst [vmem:[#allocation2 + $0x60] sm:$0xff] %v266
      %297 = vst [vmem:[#allocation2 + $0x68] sm:$0xff] %v269
      %298 = vst [vmem:[#allocation2 + $0x70] sm:$0xff] %v274
      %299 = vst [vmem:[#allocation2 + $0x78] sm:$0xff] %v277
    $region29: #{_block_forward.2} parent=1 // pred_fallthru
      _
    %p300 = scmp.ne.s32.totalorder 0, 0
    // Predicated region
    $region30: #{_block_forward.2} parent=1 // pred_check
      %p301 = pneg %p300
    $region31: #{_block_forward.2} parent=1 // pred_check_branch
      %303 = sbr.rel (%p301) target = $region33
    $region32: #{_block_forward.2} parent=1 // pred_region
      %v304 = vld [vmem:[#allocation2] sm:$0xff]
      %v305 = vld [vmem:[#allocation2 + $0x8] sm:$0xff]
      %v306 = vld [vmem:[#allocation2 + $0x10] sm:$0xff]
      %v307 = vld [vmem:[#allocation2 + $0x18] sm:$0xff]
      %v308 = vld [vmem:[#allocation2 + $0x20] sm:$0xff]
      %v309 = vld [vmem:[#allocation2 + $0x28] sm:$0xff]
      %v310 = vld [vmem:[#allocation2 + $0x30] sm:$0xff]
      %v311 = vld [vmem:[#allocation2 + $0x38] sm:$0xff]
      %v312 = vld [vmem:[#allocation2 + $0x40] sm:$0xff]
      %v313 = vld [vmem:[#allocation2 + $0x48] sm:$0xff]
      %v314 = vld [vmem:[#allocation2 + $0x50] sm:$0xff]
      %v315 = vld [vmem:[#allocation2 + $0x58] sm:$0xff]
      %v316 = vld [vmem:[#allocation2 + $0x60] sm:$0xff]
      %v317 = vld [vmem:[#allocation2 + $0x68] sm:$0xff]
      %v318 = vld [vmem:[#allocation2 + $0x70] sm:$0xff]
      %v319 = vld [vmem:[#allocation2 + $0x78] sm:$0xff]
      %v320 = vadd.f32 %v304, %v218
      %v321 = vadd.f32 %v305, %v221
      %v322 = vadd.f32 %v306, %v226
      %v323 = vadd.f32 %v307, %v229
      %v324 = vadd.f32 %v308, %v234
      %v325 = vadd.f32 %v309, %v237
      %v326 = vadd.f32 %v310, %v242
      %v327 = vadd.f32 %v311, %v245
      %v328 = vadd.f32 %v312, %v250
      %v329 = vadd.f32 %v313, %v253
      %v330 = vadd.f32 %v314, %v258
      %v331 = vadd.f32 %v315, %v261
      %v332 = vadd.f32 %v316, %v266
      %v333 = vadd.f32 %v317, %v269
      %v334 = vadd.f32 %v318, %v274
      %v335 = vadd.f32 %v319, %v277
      %336 = vst [vmem:[#allocation2] sm:$0xff] %v320
      %337 = vst [vmem:[#allocation2 + $0x8] sm:$0xff] %v321
      %338 = vst [vmem:[#allocation2 + $0x10] sm:$0xff] %v322
      %339 = vst [vmem:[#allocation2 + $0x18] sm:$0xff] %v323
      %340 = vst [vmem:[#allocation2 + $0x20] sm:$0xff] %v324
      %341 = vst [vmem:[#allocation2 + $0x28] sm:$0xff] %v325
      %342 = vst [vmem:[#allocation2 + $0x30] sm:$0xff] %v326
      %343 = vst [vmem:[#allocation2 + $0x38] sm:$0xff] %v327
      %344 = vst [vmem:[#allocation2 + $0x40] sm:$0xff] %v328
      %345 = vst [vmem:[#allocation2 + $0x48] sm:$0xff] %v329
      %346 = vst [vmem:[#allocation2 + $0x50] sm:$0xff] %v330
      %347 = vst [vmem:[#allocation2 + $0x58] sm:$0xff] %v331
      %348 = vst [vmem:[#allocation2 + $0x60] sm:$0xff] %v332
      %349 = vst [vmem:[#allocation2 + $0x68] sm:$0xff] %v333
      %350 = vst [vmem:[#allocation2 + $0x70] sm:$0xff] %v334
      %351 = vst [vmem:[#allocation2 + $0x78] sm:$0xff] %v335
    $region33: #{_block_forward.2} parent=1 // pred_fallthru
      _
    // Predicated region
    $region34: #{_block_forward.2} parent=1 // pred_check
      %p352 = pneg %p280
    $region35: #{_block_forward.2} parent=1 // pred_check_branch
      %354 = sbr.rel (%p352) target = $region37
    $region36: #{_block_forward.2} parent=1 // pred_region
      %v355 = vld [vmem:[#allocation2] sm:$0xff]
      %v356 = vld [vmem:[#allocation2 + $0x8] sm:$0xff]
      %v357 = vld [vmem:[#allocation2 + $0x10] sm:$0xff]
      %v358 = vld [vmem:[#allocation2 + $0x18] sm:$0xff]
      %v359 = vld [vmem:[#allocation2 + $0x20] sm:$0xff]
      %v360 = vld [vmem:[#allocation2 + $0x28] sm:$0xff]
      %v361 = vld [vmem:[#allocation2 + $0x30] sm:$0xff]
      %v362 = vld [vmem:[#allocation2 + $0x38] sm:$0xff]
      %v363 = vld [vmem:[#allocation2 + $0x40] sm:$0xff]
      %v364 = vld [vmem:[#allocation2 + $0x48] sm:$0xff]
      %v365 = vld [vmem:[#allocation2 + $0x50] sm:$0xff]
      %v366 = vld [vmem:[#allocation2 + $0x58] sm:$0xff]
      %v367 = vld [vmem:[#allocation2 + $0x60] sm:$0xff]
      %v368 = vld [vmem:[#allocation2 + $0x68] sm:$0xff]
      %v369 = vld [vmem:[#allocation2 + $0x70] sm:$0xff]
      %v370 = vld [vmem:[#allocation2 + $0x78] sm:$0xff]
      %v371 = vld [vmem:[#allocation8] sm:$0x1]
      %v373 = vlaneseq
      %v374 = vshrl.u32 %v373, 7
      %v375 = vsub.s32 0, %v374
      %v376 = vrot.slane %v371, %v375
      %v378 = vadd.f32 %v355, %v376
      %v379 = vadd.f32 %v356, %v376
      %v380 = vadd.f32 %v357, %v376
      %v381 = vadd.f32 %v358, %v376
      %v382 = vadd.f32 %v359, %v376
      %v383 = vadd.f32 %v360, %v376
      %v384 = vadd.f32 %v361, %v376
      %v385 = vadd.f32 %v362, %v376
      %v386 = vadd.f32 %v363, %v376
      %v387 = vadd.f32 %v364, %v376
      %v388 = vadd.f32 %v365, %v376
      %v389 = vadd.f32 %v366, %v376
      %v390 = vadd.f32 %v367, %v376
      %v391 = vadd.f32 %v368, %v376
      %v392 = vadd.f32 %v369, %v376
      %v393 = vadd.f32 %v370, %v376
      %v394 = vmax.f32 %v378, 0.0
      %v395 = vmax.f32 %v379, 0.0
      %v396 = vmax.f32 %v380, 0.0
      %v397 = vmax.f32 %v381, 0.0
      %v398 = vmax.f32 %v382, 0.0
      %v399 = vmax.f32 %v383, 0.0
      %v400 = vmax.f32 %v384, 0.0
      %v401 = vmax.f32 %v385, 0.0
      %v402 = vmax.f32 %v386, 0.0
      %v403 = vmax.f32 %v387, 0.0
      %v404 = vmax.f32 %v388, 0.0
      %v405 = vmax.f32 %v389, 0.0
      %v406 = vmax.f32 %v390, 0.0
      %v407 = vmax.f32 %v391, 0.0
      %v408 = vmax.f32 %v392, 0.0
      %v409 = vmax.f32 %v393, 0.0
      %v410 = vpack.c.bf16 %v395, %v394
      %v411 = vpack.c.bf16 %v397, %v396
      %v412 = vpack.c.bf16 %v399, %v398
      %v413 = vpack.c.bf16 %v401, %v400
      %v414 = vpack.c.bf16 %v403, %v402
      %v415 = vpack.c.bf16 %v405, %v404
      %v416 = vpack.c.bf16 %v407, %v406
      %v417 = vpack.c.bf16 %v409, %v408
      %v426 = vunpack.c.l.b16 %v410
      %v427 = vunpack.c.h.b16 %v410
      %v428 = vunpack.c.l.b16 %v411
      %v429 = vunpack.c.h.b16 %v411
      %v430 = vunpack.c.l.b16 %v412
      %v431 = vunpack.c.h.b16 %v412
      %v432 = vunpack.c.l.b16 %v413
      %v433 = vunpack.c.h.b16 %v413
      %v434 = vunpack.c.l.b16 %v414
      %v435 = vunpack.c.h.b16 %v414
      %v436 = vunpack.c.l.b16 %v415
      %v437 = vunpack.c.h.b16 %v415
      %v438 = vunpack.c.l.b16 %v416
      %v439 = vunpack.c.h.b16 %v416
      %v440 = vunpack.c.l.b16 %v417
      %v441 = vunpack.c.h.b16 %v417
      %v442 = vpack.c.b16 %v426, %v426
      %v443 = vpack.c.b16 %v427, %v427
      %v444 = vpack.c.b16 %v428, %v428
      %v445 = vpack.c.b16 %v429, %v429
      %v446 = vpack.c.b16 %v430, %v430
      %v447 = vpack.c.b16 %v431, %v431
      %v448 = vpack.c.b16 %v432, %v432
      %v449 = vpack.c.b16 %v433, %v433
      %v450 = vpack.c.b16 %v434, %v434
      %v451 = vpack.c.b16 %v435, %v435
      %v452 = vpack.c.b16 %v436, %v436
      %v453 = vpack.c.b16 %v437, %v437
      %v454 = vpack.c.b16 %v438, %v438
      %v455 = vpack.c.b16 %v439, %v439
      %v456 = vpack.c.b16 %v440, %v440
      %v457 = vpack.c.b16 %v441, %v441
      %474 = vst [vmem:[#allocation9] sm:$0xf] %v442
      %475 = vst [vmem:[#allocation9 + $0x4] sm:$0xf] %v443
      %476 = vst [vmem:[#allocation9 + $0x8] sm:$0xf] %v444
      %477 = vst [vmem:[#allocation9 + $0xc] sm:$0xf] %v445
      %478 = vst [vmem:[#allocation9 + $0x10] sm:$0xf] %v446
      %479 = vst [vmem:[#allocation9 + $0x14] sm:$0xf] %v447
      %480 = vst [vmem:[#allocation9 + $0x18] sm:$0xf] %v448
      %481 = vst [vmem:[#allocation9 + $0x1c] sm:$0xf] %v449
      %482 = vst [vmem:[#allocation9 + $0x20] sm:$0xf] %v450
      %483 = vst [vmem:[#allocation9 + $0x24] sm:$0xf] %v451
      %484 = vst [vmem:[#allocation9 + $0x28] sm:$0xf] %v452
      %485 = vst [vmem:[#allocation9 + $0x2c] sm:$0xf] %v453
      %486 = vst [vmem:[#allocation9 + $0x30] sm:$0xf] %v454
      %487 = vst [vmem:[#allocation9 + $0x34] sm:$0xf] %v455
      %488 = vst [vmem:[#allocation9 + $0x38] sm:$0xf] %v456
      %489 = vst [vmem:[#allocation9 + $0x3c] sm:$0xf] %v457
    $region37: #{_block_forward.2} parent=1 // pred_fallthru
      _
    // Predicated region
    $region38: #{_block_forward.2} parent=1 // pred_check
      _
    $region39: #{_block_forward.2} parent=1 // pred_check_branch
      %491 = sbr.rel (0) target = $region41
    $region40: #{_block_forward.2} parent=1 // pred_region
      %s493 = ssub.s32 1024, 1024
      %494 = vsyncadd [#allocation5], %s493
      %s495 = sshll.u32 [#allocation9], 4
      %s496 = int_to_ptr.vmem [resolvable:$true] %s495
      %501 = dma.vmem_to_hbm [thread:$0]  %s496, 1024, %s3, [#allocation5], 64, 64, 4
    $region41: #{_block_forward.2} parent=1 // pred_fallthru
      _
    // Predicated region
    $region42: #{_block_forward.2} parent=1 // pred_check
      _
    $region43: #{_block_forward.2} parent=1 // pred_check_branch
      %503 = sbr.rel (0) target = $region45
    $region44: #{_block_forward.2} parent=1 // pred_region
      %504 = dma.done [#allocation5], 1024
    $region45: #{_block_forward.2} parent=1 // pred_fallthru
      _
    %505 = vsyncpa [#allocation4], 1
    %506 = vsyncpa [#allocation7], 1
    %507 = vsyncpa [#allocation5], 1

// kernel: _block_forward.3
$region0: #{_block_forward.3}
  #allocation0 [shape = 'u32[]', space=smem, size = 0x4, offset = 0x4, fixed_abs, tag = 'smem constant byte address 0x4 - core index']
  #allocation1 [shape = 'u32[144,128]{1,0:T(1,128)}', space=vmem, size = 0x12000, scoped, tag = 'internal scratch']
  #allocation2 [shape = 'f32[128,128]{1,0:T(8,128)}', space=vmem, size = 0x10000, scoped, tag = 'scratch operand']
  %s0 = inlined_call_operand.hbm [shape: bf16[128,128], index: 0, kind: input, shape index: {}]
  %s1 = inlined_call_operand.hbm [shape: bf16[128,128], index: 1, kind: input, shape index: {}]
  %s2 = inlined_call_operand.hbm [shape: f32[1,128], index: 2, kind: input, shape index: {}]
  %s3 = inlined_call_operand.hbm [shape: bf16[128,128], index: 3, kind: input, shape index: {}]
  %s4 = inlined_call_operand.hbm [shape: bf16[128,128], index: 4, kind: input, shape index: {}]
  %s5 = inlined_call_operand.hbm [shape: f32[128,128], index: 5, kind: output, shape index: {}]
  %s6 = sld [smem:[#allocation0]]
  $region62: #{_block_forward.3} parent=0
    _
  %s8 = ssub.s32 1, %s6
  %s9 = scalar_select 0, %s8, %s6
  $region1: #{_block_forward.3} parent=0
    #allocation3 [shape = 'u8[32768]{0}', space=vmem, size = 0x8000, scoped, tag = 'input window, operand 0, single buffered']
    #allocation4 [shape = 's32[1]{0}', space=sflag, size = 0x4, scoped, tag = 'scoped memory for _block_forward.3']
    #allocation5 [shape = 's32[1]{0}', space=sflag, size = 0x4, scoped, tag = 'scoped memory for _block_forward.3']
    #allocation6 [shape = 'u8[32768]{0}', space=vmem, size = 0x8000, scoped, tag = 'input window, operand 1, single buffered']
    #allocation7 [shape = 's32[1]{0}', space=sflag, size = 0x4, scoped, tag = 'scoped memory for _block_forward.3']
    #allocation8 [shape = 'u8[512]{0}', space=vmem, size = 0x400, scoped, tag = 'input window, operand 2, single buffered']
    #allocation9 [shape = 'u8[32768]{0}', space=vmem, size = 0x8000, scoped, tag = 'input window, operand 3, single buffered']
    #allocation10 [shape = 's32[1]{0}', space=sflag, size = 0x4, scoped, tag = 'scoped memory for _block_forward.3']
    #allocation11 [shape = 'u8[32768]{0}', space=vmem, size = 0x8000, scoped, tag = 'input window, operand 4, single buffered']
    #allocation12 [shape = 'u8[65536]{0}', space=vmem, size = 0x10000, scoped, tag = 'output window, operand 0, single buffered']
    %10 = vsyncpa [#allocation4], 0
    %11 = vsyncpa [#allocation7], 0
    %12 = vsyncpa [#allocation10], 0
    %13 = vsyncpa [#allocation5], 0
    // Predicated region
    $region2: #{_block_forward.3} parent=1 // pred_check
      _
    $region3: #{_block_forward.3} parent=1 // pred_check_branch
      %15 = sbr.rel (0) target = $region5
    $region4: #{_block_forward.3} parent=1 // pred_region
      %s17 = ssub.s32 1024, 1024
      %18 = vsyncadd [#allocation4], %s17
      %s19 = sshll.u32 [#allocation3], 4
      %s20 = int_to_ptr.vmem [resolvable:$true] %s19
      %25 = dma.hbm_to_vmem [thread:$0]  %s0, 1024, %s20, [#allocation4], 64, 64, 4
    $region5: #{_block_forward.3} parent=1 // pred_fallthru
      _
    // Predicated region
    $region6: #{_block_forward.3} parent=1 // pred_check
      _
    $region7: #{_block_forward.3} parent=1 // pred_check_branch
      %27 = sbr.rel (0) target = $region9
    $region8: #{_block_forward.3} parent=1 // pred_region
      %s29 = ssub.s32 1024, 1024
      %30 = vsyncadd [#allocation7], %s29
      %s31 = sshll.u32 [#allocation6], 4
      %s32 = int_to_ptr.vmem [resolvable:$true] %s31
      %37 = dma.hbm_to_vmem [thread:$0]  %s1, 1024, %s32, [#allocation7], 64, 64, 4
    $region9: #{_block_forward.3} parent=1 // pred_fallthru
      _
    // Predicated region
    $region10: #{_block_forward.3} parent=1 // pred_check
      _
    $region11: #{_block_forward.3} parent=1 // pred_check_branch
      %39 = sbr.rel (0) target = $region13
    $region12: #{_block_forward.3} parent=1 // pred_region
      %s41 = ssub.s32 16, 16
      %42 = vsyncadd [#allocation7], %s41
      %s44 = sshll.u32 [#allocation8], 4
      %s45 = int_to_ptr.vmem [resolvable:$true] %s44
      %47 = dma.hbm_to_vmem [thread:$0]  %s2, 16, %s45, [#allocation7]
    $region13: #{_block_forward.3} parent=1 // pred_fallthru
      _
    // Predicated region
    $region14: #{_block_forward.3} parent=1 // pred_check
      _
    $region15: #{_block_forward.3} parent=1 // pred_check_branch
      %49 = sbr.rel (0) target = $region17
    $region16: #{_block_forward.3} parent=1 // pred_region
      %s51 = ssub.s32 1024, 1024
      %52 = vsyncadd [#allocation10], %s51
      %s53 = sshll.u32 [#allocation9], 4
      %s54 = int_to_ptr.vmem [resolvable:$true] %s53
      %59 = dma.hbm_to_vmem [thread:$0]  %s3, 1024, %s54, [#allocation10], 64, 64, 4
    $region17: #{_block_forward.3} parent=1 // pred_fallthru
      _
    // Predicated region
    $region18: #{_block_forward.3} parent=1 // pred_check
      _
    $region19: #{_block_forward.3} parent=1 // pred_check_branch
      %61 = sbr.rel (0) target = $region21
    $region20: #{_block_forward.3} parent=1 // pred_region
      %s63 = ssub.s32 1024, 1024
      %64 = vsyncadd [#allocation10], %s63
      %s65 = sshll.u32 [#allocation11], 4
      %s66 = int_to_ptr.vmem [resolvable:$true] %s65
      %71 = dma.hbm_to_vmem [thread:$0]  %s4, 1024, %s66, [#allocation10], 64, 64, 4
    $region21: #{_block_forward.3} parent=1 // pred_fallthru
      _
    // Predicated region
    $region22: #{_block_forward.3} parent=1 // pred_check
      _
    $region23: #{_block_forward.3} parent=1 // pred_check_branch
      %73 = sbr.rel (0) target = $region25
    $region24: #{_block_forward.3} parent=1 // pred_region
      %74 = dma.done [#allocation4], 1024
    $region25: #{_block_forward.3} parent=1 // pred_fallthru
      _
    // Predicated region
    $region26: #{_block_forward.3} parent=1 // pred_check
      _
    $region27: #{_block_forward.3} parent=1 // pred_check_branch
      %76 = sbr.rel (0) target = $region29
    $region28: #{_block_forward.3} parent=1 // pred_region
      %77 = dma.done [#allocation7], 1024
    $region29: #{_block_forward.3} parent=1 // pred_fallthru
      _
    // Predicated region
    $region30: #{_block_forward.3} parent=1 // pred_check
      _
    $region31: #{_block_forward.3} parent=1 // pred_check_branch
      %79 = sbr.rel (0) target = $region33
    $region32: #{_block_forward.3} parent=1 // pred_region
      %80 = dma.done [#allocation7], 16
    $region33: #{_block_forward.3} parent=1 // pred_fallthru
      _
    // Predicated region
    $region34: #{_block_forward.3} parent=1 // pred_check
      _
    $region35: #{_block_forward.3} parent=1 // pred_check_branch
      %82 = sbr.rel (0) target = $region37
    $region36: #{_block_forward.3} parent=1 // pred_region
      %83 = dma.done [#allocation10], 1024
    $region37: #{_block_forward.3} parent=1 // pred_fallthru
      _
    // Predicated region
    $region38: #{_block_forward.3} parent=1 // pred_check
      _
    $region39: #{_block_forward.3} parent=1 // pred_check_branch
      %85 = sbr.rel (0) target = $region41
    $region40: #{_block_forward.3} parent=1 // pred_region
      %86 = dma.done [#allocation10], 1024
    $region41: #{_block_forward.3} parent=1 // pred_fallthru
      _
    %v88 = vld [vmem:[#allocation3] sm:$0xf]
    %v89 = vld [vmem:[#allocation3 + $0x4] sm:$0xf]
    %v90 = vld [vmem:[#allocation3 + $0x8] sm:$0xf]
    %v91 = vld [vmem:[#allocation3 + $0xc] sm:$0xf]
    %v92 = vld [vmem:[#allocation3 + $0x10] sm:$0xf]
    %v93 = vld [vmem:[#allocation3 + $0x14] sm:$0xf]
    %v94 = vld [vmem:[#allocation3 + $0x18] sm:$0xf]
    %v95 = vld [vmem:[#allocation3 + $0x1c] sm:$0xf]
    %v96 = vld [vmem:[#allocation3 + $0x20] sm:$0xf]
    %v97 = vld [vmem:[#allocation3 + $0x24] sm:$0xf]
    %v98 = vld [vmem:[#allocation3 + $0x28] sm:$0xf]
    %v99 = vld [vmem:[#allocation3 + $0x2c] sm:$0xf]
    %v100 = vld [vmem:[#allocation3 + $0x30] sm:$0xf]
    %v101 = vld [vmem:[#allocation3 + $0x34] sm:$0xf]
    %v102 = vld [vmem:[#allocation3 + $0x38] sm:$0xf]
    %v103 = vld [vmem:[#allocation3 + $0x3c] sm:$0xf]
    %v104 = vld [vmem:[#allocation6] sm:$0xf]
    %v105 = vld [vmem:[#allocation6 + $0x4] sm:$0xf]
    %v106 = vld [vmem:[#allocation6 + $0x8] sm:$0xf]
    %v107 = vld [vmem:[#allocation6 + $0xc] sm:$0xf]
    %v108 = vld [vmem:[#allocation6 + $0x10] sm:$0xf]
    %v109 = vld [vmem:[#allocation6 + $0x14] sm:$0xf]
    %v110 = vld [vmem:[#allocation6 + $0x18] sm:$0xf]
    %v111 = vld [vmem:[#allocation6 + $0x1c] sm:$0xf]
    %v112 = vld [vmem:[#allocation6 + $0x20] sm:$0xf]
    %v113 = vld [vmem:[#allocation6 + $0x24] sm:$0xf]
    %v114 = vld [vmem:[#allocation6 + $0x28] sm:$0xf]
    %v115 = vld [vmem:[#allocation6 + $0x2c] sm:$0xf]
    %v116 = vld [vmem:[#allocation6 + $0x30] sm:$0xf]
    %v117 = vld [vmem:[#allocation6 + $0x34] sm:$0xf]
    %v118 = vld [vmem:[#allocation6 + $0x38] sm:$0xf]
    %v119 = vld [vmem:[#allocation6 + $0x3c] sm:$0xf]
    %v136 = vunpack.c.l.b16 %v88
    %v137 = vunpack.c.l.b16 %v89
    %v138 = vunpack.c.l.b16 %v90
    %v139 = vunpack.c.l.b16 %v91
    %v140 = vunpack.c.l.b16 %v92
    %v141 = vunpack.c.l.b16 %v93
    %v142 = vunpack.c.l.b16 %v94
    %v143 = vunpack.c.l.b16 %v95
    %v144 = vunpack.c.l.b16 %v96
    %v145 = vunpack.c.l.b16 %v97
    %v146 = vunpack.c.l.b16 %v98
    %v147 = vunpack.c.l.b16 %v99
    %v148 = vunpack.c.l.b16 %v100
    %v149 = vunpack.c.l.b16 %v101
    %v150 = vunpack.c.l.b16 %v102
    %v151 = vunpack.c.l.b16 %v103
    %v152 = vpack.c.b16 %v137, %v136
    %v153 = vpack.c.b16 %v139, %v138
    %v154 = vpack.c.b16 %v141, %v140
    %v155 = vpack.c.b16 %v143, %v142
    %v156 = vpack.c.b16 %v145, %v144
    %v157 = vpack.c.b16 %v147, %v146
    %v158 = vpack.c.b16 %v149, %v148
    %v159 = vpack.c.b16 %v151, %v150
    %v184 = vunpack.c.l.b16 %v104
    %v185 = vunpack.c.l.b16 %v105
    %v186 = vunpack.c.l.b16 %v106
    %v187 = vunpack.c.l.b16 %v107
    %v188 = vunpack.c.l.b16 %v108
    %v189 = vunpack.c.l.b16 %v109
    %v190 = vunpack.c.l.b16 %v110
    %v191 = vunpack.c.l.b16 %v111
    %v192 = vunpack.c.l.b16 %v112
    %v193 = vunpack.c.l.b16 %v113
    %v194 = vunpack.c.l.b16 %v114
    %v195 = vunpack.c.l.b16 %v115
    %v196 = vunpack.c.l.b16 %v116
    %v197 = vunpack.c.l.b16 %v117
    %v198 = vunpack.c.l.b16 %v118
    %v199 = vunpack.c.l.b16 %v119
    %v200 = vpack.c.b16 %v185, %v184
    %v201 = vpack.c.b16 %v187, %v186
    %v202 = vpack.c.b16 %v189, %v188
    %v203 = vpack.c.b16 %v191, %v190
    %v204 = vpack.c.b16 %v193, %v192
    %v205 = vpack.c.b16 %v195, %v194
    %v206 = vpack.c.b16 %v197, %v196
    %v207 = vpack.c.b16 %v199, %v198
    %216 = vmatprep.subr.bf16.mxu0 0
    %217 = vmatpush1.bf16.msra.mxu0 %v200
    %218 = vmatprep.subr.bf16.mxu0 0
    %219 = vmatpush1.bf16.msra.mxu0 %v201
    %220 = vmatprep.subr.bf16.mxu0 0
    %221 = vmatpush1.bf16.msra.mxu0 %v202
    %222 = vmatprep.subr.bf16.mxu0 0
    %223 = vmatpush1.bf16.msra.mxu0 %v203
    %224 = vmatprep.subr.bf16.mxu0 0
    %225 = vmatpush1.bf16.msra.mxu0 %v204
    %226 = vmatprep.subr.bf16.mxu0 0
    %227 = vmatpush1.bf16.msra.mxu0 %v205
    %228 = vmatprep.subr.bf16.mxu0 0
    %229 = vmatpush1.bf16.msra.mxu0 %v206
    %230 = vmatprep.subr.bf16.mxu0 0
    %231 = vmatpush1.bf16.msra.mxu0 %v207
    %232 = vmatprep.subr.bf16.mxu0 0
    %233 = vmatpush1.bf16.msra.mxu0 0
    %234 = vmatprep.subr.bf16.mxu0 0
    %235 = vmatpush1.bf16.msra.mxu0 0
    %236 = vmatprep.subr.bf16.mxu0 0
    %237 = vmatpush1.bf16.msra.mxu0 0
    %238 = vmatprep.subr.bf16.mxu0 0
    %239 = vmatpush1.bf16.msra.mxu0 0
    %240 = vmatprep.subr.bf16.mxu0 0
    %241 = vmatpush1.bf16.msra.mxu0 0
    %242 = vmatprep.subr.bf16.mxu0 0
    %243 = vmatpush1.bf16.msra.mxu0 0
    %244 = vmatprep.subr.bf16.mxu0 0
    %245 = vmatpush1.bf16.msra.mxu0 0
    %246 = vmatprep.subr.bf16.mxu0 0
    %247 = vmatpush1.bf16.msra.mxu0 0
    %248 = vmatprep.mubr.bf16.mxu0 0
    %249 = vmatmul.mubr.bf16.gmra.mrb[0].mxu0 %v152
    %v250 = vpop.f32.mrb[0].mxu0
    %v251 = vadd.f32 0.0, %v250
    %v252 = vpop.f32.mrb[0].mxu0
    %v253 = vpop.f32.mrb[0].mxu0
    %v254 = vadd.f32 0.0, %v253
    %v255 = vpop.f32.mrb[0].mxu0
    %256 = vmatprep.mubr.bf16.mxu0 0
    %257 = vmatmul.mubr.bf16.gmra.mrb[0].mxu0 %v153
    %v258 = vpop.f32.mrb[0].mxu0
    %v259 = vadd.f32 0.0, %v258
    %v260 = vpop.f32.mrb[0].mxu0
    %v261 = vpop.f32.mrb[0].mxu0
    %v262 = vadd.f32 0.0, %v261
    %v263 = vpop.f32.mrb[0].mxu0
    %264 = vmatprep.mubr.bf16.mxu0 0
    %265 = vmatmul.mubr.bf16.gmra.mrb[0].mxu0 %v154
    %v266 = vpop.f32.mrb[0].mxu0
    %v267 = vadd.f32 0.0, %v266
    %v268 = vpop.f32.mrb[0].mxu0
    %v269 = vpop.f32.mrb[0].mxu0
    %v270 = vadd.f32 0.0, %v269
    %v271 = vpop.f32.mrb[0].mxu0
    %272 = vmatprep.mubr.bf16.mxu0 0
    %273 = vmatmul.mubr.bf16.gmra.mrb[0].mxu0 %v155
    %v274 = vpop.f32.mrb[0].mxu0
    %v275 = vadd.f32 0.0, %v274
    %v276 = vpop.f32.mrb[0].mxu0
    %v277 = vpop.f32.mrb[0].mxu0
    %v278 = vadd.f32 0.0, %v277
    %v279 = vpop.f32.mrb[0].mxu0
    %280 = vmatprep.mubr.bf16.mxu0 0
    %281 = vmatmul.mubr.bf16.gmra.mrb[0].mxu0 %v156
    %v282 = vpop.f32.mrb[0].mxu0
    %v283 = vadd.f32 0.0, %v282
    %v284 = vpop.f32.mrb[0].mxu0
    %v285 = vpop.f32.mrb[0].mxu0
    %v286 = vadd.f32 0.0, %v285
    %v287 = vpop.f32.mrb[0].mxu0
    %288 = vmatprep.mubr.bf16.mxu0 0
    %289 = vmatmul.mubr.bf16.gmra.mrb[0].mxu0 %v157
    %v290 = vpop.f32.mrb[0].mxu0
    %v291 = vadd.f32 0.0, %v290
    %v292 = vpop.f32.mrb[0].mxu0
    %v293 = vpop.f32.mrb[0].mxu0
    %v294 = vadd.f32 0.0, %v293
    %v295 = vpop.f32.mrb[0].mxu0
    %296 = vmatprep.mubr.bf16.mxu0 0
    %297 = vmatmul.mubr.bf16.gmra.mrb[0].mxu0 %v158
    %v298 = vpop.f32.mrb[0].mxu0
    %v299 = vadd.f32 0.0, %v298
    %v300 = vpop.f32.mrb[0].mxu0
    %v301 = vpop.f32.mrb[0].mxu0
    %v302 = vadd.f32 0.0, %v301
    %v303 = vpop.f32.mrb[0].mxu0
    %304 = vmatprep.mubr.bf16.mxu0 0
    %305 = vmatmul.mubr.bf16.gmra.mrb[0].mxu0 %v159
    %v306 = vpop.f32.mrb[0].mxu0
    %v307 = vadd.f32 0.0, %v306
    %v308 = vpop.f32.mrb[0].mxu0
    %v309 = vpop.f32.mrb[0].mxu0
    %v310 = vadd.f32 0.0, %v309
    %v311 = vpop.f32.mrb[0].mxu0
    %312 = vdwg.mxu0
    %p313 = scmp.eq.s32.totalorder 0, 0
    // Predicated region
    $region42: #{_block_forward.3} parent=1 // pred_check
      %p314 = pneg %p313
    $region43: #{_block_forward.3} parent=1 // pred_check_branch
      %316 = sbr.rel (%p314) target = $region45
    $region44: #{_block_forward.3} parent=1 // pred_region
      %317 = vst [vmem:[#allocation2] sm:$0xff] %v251
      %318 = vst [vmem:[#allocation2 + $0x8] sm:$0xff] %v254
      %319 = vst [vmem:[#allocation2 + $0x10] sm:$0xff] %v259
      %320 = vst [vmem:[#allocation2 + $0x18] sm:$0xff] %v262
      %321 = vst [vmem:[#allocation2 + $0x20] sm:$0xff] %v267
      %322 = vst [vmem:[#allocation2 + $0x28] sm:$0xff] %v270
      %323 = vst [vmem:[#allocation2 + $0x30] sm:$0xff] %v275
      %324 = vst [vmem:[#allocation2 + $0x38] sm:$0xff] %v278
      %325 = vst [vmem:[#allocation2 + $0x40] sm:$0xff] %v283
      %326 = vst [vmem:[#allocation2 + $0x48] sm:$0xff] %v286
      %327 = vst [vmem:[#allocation2 + $0x50] sm:$0xff] %v291
      %328 = vst [vmem:[#allocation2 + $0x58] sm:$0xff] %v294
      %329 = vst [vmem:[#allocation2 + $0x60] sm:$0xff] %v299
      %330 = vst [vmem:[#allocation2 + $0x68] sm:$0xff] %v302
      %331 = vst [vmem:[#allocation2 + $0x70] sm:$0xff] %v307
      %332 = vst [vmem:[#allocation2 + $0x78] sm:$0xff] %v310
    $region45: #{_block_forward.3} parent=1 // pred_fallthru
      _
    %p333 = scmp.ne.s32.totalorder 0, 0
    // Predicated region
    $region46: #{_block_forward.3} parent=1 // pred_check
      %p334 = pneg %p333
    $region47: #{_block_forward.3} parent=1 // pred_check_branch
      %336 = sbr.rel (%p334) target = $region49
    $region48: #{_block_forward.3} parent=1 // pred_region
      %v337 = vld [vmem:[#allocation2] sm:$0xff]
      %v338 = vld [vmem:[#allocation2 + $0x8] sm:$0xff]
      %v339 = vld [vmem:[#allocation2 + $0x10] sm:$0xff]
      %v340 = vld [vmem:[#allocation2 + $0x18] sm:$0xff]
      %v341 = vld [vmem:[#allocation2 + $0x20] sm:$0xff]
      %v342 = vld [vmem:[#allocation2 + $0x28] sm:$0xff]
      %v343 = vld [vmem:[#allocation2 + $0x30] sm:$0xff]
      %v344 = vld [vmem:[#allocation2 + $0x38] sm:$0xff]
      %v345 = vld [vmem:[#allocation2 + $0x40] sm:$0xff]
      %v346 = vld [vmem:[#allocation2 + $0x48] sm:$0xff]
      %v347 = vld [vmem:[#allocation2 + $0x50] sm:$0xff]
      %v348 = vld [vmem:[#allocation2 + $0x58] sm:$0xff]
      %v349 = vld [vmem:[#allocation2 + $0x60] sm:$0xff]
      %v350 = vld [vmem:[#allocation2 + $0x68] sm:$0xff]
      %v351 = vld [vmem:[#allocation2 + $0x70] sm:$0xff]
      %v352 = vld [vmem:[#allocation2 + $0x78] sm:$0xff]
      %v353 = vadd.f32 %v337, %v251
      %v354 = vadd.f32 %v338, %v254
      %v355 = vadd.f32 %v339, %v259
      %v356 = vadd.f32 %v340, %v262
      %v357 = vadd.f32 %v341, %v267
      %v358 = vadd.f32 %v342, %v270
      %v359 = vadd.f32 %v343, %v275
      %v360 = vadd.f32 %v344, %v278
      %v361 = vadd.f32 %v345, %v283
      %v362 = vadd.f32 %v346, %v286
      %v363 = vadd.f32 %v347, %v291
      %v364 = vadd.f32 %v348, %v294
      %v365 = vadd.f32 %v349, %v299
      %v366 = vadd.f32 %v350, %v302
      %v367 = vadd.f32 %v351, %v307
      %v368 = vadd.f32 %v352, %v310
      %369 = vst [vmem:[#allocation2] sm:$0xff] %v353
      %370 = vst [vmem:[#allocation2 + $0x8] sm:$0xff] %v354
      %371 = vst [vmem:[#allocation2 + $0x10] sm:$0xff] %v355
      %372 = vst [vmem:[#allocation2 + $0x18] sm:$0xff] %v356
      %373 = vst [vmem:[#allocation2 + $0x20] sm:$0xff] %v357
      %374 = vst [vmem:[#allocation2 + $0x28] sm:$0xff] %v358
      %375 = vst [vmem:[#allocation2 + $0x30] sm:$0xff] %v359
      %376 = vst [vmem:[#allocation2 + $0x38] sm:$0xff] %v360
      %377 = vst [vmem:[#allocation2 + $0x40] sm:$0xff] %v361
      %378 = vst [vmem:[#allocation2 + $0x48] sm:$0xff] %v362
      %379 = vst [vmem:[#allocation2 + $0x50] sm:$0xff] %v363
      %380 = vst [vmem:[#allocation2 + $0x58] sm:$0xff] %v364
      %381 = vst [vmem:[#allocation2 + $0x60] sm:$0xff] %v365
      %382 = vst [vmem:[#allocation2 + $0x68] sm:$0xff] %v366
      %383 = vst [vmem:[#allocation2 + $0x70] sm:$0xff] %v367
      %384 = vst [vmem:[#allocation2 + $0x78] sm:$0xff] %v368
    $region49: #{_block_forward.3} parent=1 // pred_fallthru
      _
    // Predicated region
    $region50: #{_block_forward.3} parent=1 // pred_check
      %p385 = pneg %p313
    $region51: #{_block_forward.3} parent=1 // pred_check_branch
      %387 = sbr.rel (%p385) target = $region53
    $region52: #{_block_forward.3} parent=1 // pred_region
      %v388 = vld [vmem:[#allocation9] sm:$0xf]
      %v389 = vld [vmem:[#allocation9 + $0x4] sm:$0xf]
      %v390 = vld [vmem:[#allocation9 + $0x8] sm:$0xf]
      %v391 = vld [vmem:[#allocation9 + $0xc] sm:$0xf]
      %v392 = vld [vmem:[#allocation9 + $0x10] sm:$0xf]
      %v393 = vld [vmem:[#allocation9 + $0x14] sm:$0xf]
      %v394 = vld [vmem:[#allocation9 + $0x18] sm:$0xf]
      %v395 = vld [vmem:[#allocation9 + $0x1c] sm:$0xf]
      %v396 = vld [vmem:[#allocation9 + $0x20] sm:$0xf]
      %v397 = vld [vmem:[#allocation9 + $0x24] sm:$0xf]
      %v398 = vld [vmem:[#allocation9 + $0x28] sm:$0xf]
      %v399 = vld [vmem:[#allocation9 + $0x2c] sm:$0xf]
      %v400 = vld [vmem:[#allocation9 + $0x30] sm:$0xf]
      %v401 = vld [vmem:[#allocation9 + $0x34] sm:$0xf]
      %v402 = vld [vmem:[#allocation9 + $0x38] sm:$0xf]
      %v403 = vld [vmem:[#allocation9 + $0x3c] sm:$0xf]
      %v404 = vld [vmem:[#allocation11] sm:$0xf]
      %v405 = vld [vmem:[#allocation11 + $0x4] sm:$0xf]
      %v406 = vld [vmem:[#allocation11 + $0x8] sm:$0xf]
      %v407 = vld [vmem:[#allocation11 + $0xc] sm:$0xf]
      %v408 = vld [vmem:[#allocation11 + $0x10] sm:$0xf]
      %v409 = vld [vmem:[#allocation11 + $0x14] sm:$0xf]
      %v410 = vld [vmem:[#allocation11 + $0x18] sm:$0xf]
      %v411 = vld [vmem:[#allocation11 + $0x1c] sm:$0xf]
      %v412 = vld [vmem:[#allocation11 + $0x20] sm:$0xf]
      %v413 = vld [vmem:[#allocation11 + $0x24] sm:$0xf]
      %v414 = vld [vmem:[#allocation11 + $0x28] sm:$0xf]
      %v415 = vld [vmem:[#allocation11 + $0x2c] sm:$0xf]
      %v416 = vld [vmem:[#allocation11 + $0x30] sm:$0xf]
      %v417 = vld [vmem:[#allocation11 + $0x34] sm:$0xf]
      %v418 = vld [vmem:[#allocation11 + $0x38] sm:$0xf]
      %v419 = vld [vmem:[#allocation11 + $0x3c] sm:$0xf]
      %v436 = vunpack.c.l.b16 %v388
      %v437 = vunpack.c.l.b16 %v389
      %v438 = vunpack.c.l.b16 %v390
      %v439 = vunpack.c.l.b16 %v391
      %v440 = vunpack.c.l.b16 %v392
      %v441 = vunpack.c.l.b16 %v393
      %v442 = vunpack.c.l.b16 %v394
      %v443 = vunpack.c.l.b16 %v395
      %v444 = vunpack.c.l.b16 %v396
      %v445 = vunpack.c.l.b16 %v397
      %v446 = vunpack.c.l.b16 %v398
      %v447 = vunpack.c.l.b16 %v399
      %v448 = vunpack.c.l.b16 %v400
      %v449 = vunpack.c.l.b16 %v401
      %v450 = vunpack.c.l.b16 %v402
      %v451 = vunpack.c.l.b16 %v403
      %v452 = vpack.c.b16 %v437, %v436
      %v453 = vpack.c.b16 %v439, %v438
      %v454 = vpack.c.b16 %v441, %v440
      %v455 = vpack.c.b16 %v443, %v442
      %v456 = vpack.c.b16 %v445, %v444
      %v457 = vpack.c.b16 %v447, %v446
      %v458 = vpack.c.b16 %v449, %v448
      %v459 = vpack.c.b16 %v451, %v450
      %v484 = vunpack.c.l.b16 %v404
      %v485 = vunpack.c.l.b16 %v405
      %v486 = vunpack.c.l.b16 %v406
      %v487 = vunpack.c.l.b16 %v407
      %v488 = vunpack.c.l.b16 %v408
      %v489 = vunpack.c.l.b16 %v409
      %v490 = vunpack.c.l.b16 %v410
      %v491 = vunpack.c.l.b16 %v411
      %v492 = vunpack.c.l.b16 %v412
      %v493 = vunpack.c.l.b16 %v413
      %v494 = vunpack.c.l.b16 %v414
      %v495 = vunpack.c.l.b16 %v415
      %v496 = vunpack.c.l.b16 %v416
      %v497 = vunpack.c.l.b16 %v417
      %v498 = vunpack.c.l.b16 %v418
      %v499 = vunpack.c.l.b16 %v419
      %v500 = vpack.c.b16 %v485, %v484
      %v501 = vpack.c.b16 %v487, %v486
      %v502 = vpack.c.b16 %v489, %v488
      %v503 = vpack.c.b16 %v491, %v490
      %v504 = vpack.c.b16 %v493, %v492
      %v505 = vpack.c.b16 %v495, %v494
      %v506 = vpack.c.b16 %v497, %v496
      %v507 = vpack.c.b16 %v499, %v498
      %516 = vmatprep.subr.bf16.mxu0 0
      %517 = vmatpush1.bf16.msra.mxu0 %v500
      %518 = vmatprep.subr.bf16.mxu0 0
      %519 = vmatpush1.bf16.msra.mxu0 %v501
      %520 = vmatprep.subr.bf16.mxu0 0
      %521 = vmatpush1.bf16.msra.mxu0 %v502
      %522 = vmatprep.subr.bf16.mxu0 0
      %523 = vmatpush1.bf16.msra.mxu0 %v503
      %524 = vmatprep.subr.bf16.mxu0 0
      %525 = vmatpush1.bf16.msra.mxu0 %v504
      %526 = vmatprep.subr.bf16.mxu0 0
      %527 = vmatpush1.bf16.msra.mxu0 %v505
      %528 = vmatprep.subr.bf16.mxu0 0
      %529 = vmatpush1.bf16.msra.mxu0 %v506
      %530 = vmatprep.subr.bf16.mxu0 0
      %531 = vmatpush1.bf16.msra.mxu0 %v507
      %532 = vmatprep.subr.bf16.mxu0 0
      %533 = vmatpush1.bf16.msra.mxu0 0
      %534 = vmatprep.subr.bf16.mxu0 0
      %535 = vmatpush1.bf16.msra.mxu0 0
      %536 = vmatprep.subr.bf16.mxu0 0
      %537 = vmatpush1.bf16.msra.mxu0 0
      %538 = vmatprep.subr.bf16.mxu0 0
      %539 = vmatpush1.bf16.msra.mxu0 0
      %540 = vmatprep.subr.bf16.mxu0 0
      %541 = vmatpush1.bf16.msra.mxu0 0
      %542 = vmatprep.subr.bf16.mxu0 0
      %543 = vmatpush1.bf16.msra.mxu0 0
      %544 = vmatprep.subr.bf16.mxu0 0
      %545 = vmatpush1.bf16.msra.mxu0 0
      %546 = vmatprep.subr.bf16.mxu0 0
      %547 = vmatpush1.bf16.msra.mxu0 0
      %548 = vmatprep.mubr.bf16.mxu0 0
      %549 = vmatmul.mubr.bf16.gmra.mrb[0].mxu0 %v452
      %v550 = vpop.f32.mrb[0].mxu0
      %v551 = vadd.f32 0.0, %v550
      %v552 = vpop.f32.mrb[0].mxu0
      %v553 = vpop.f32.mrb[0].mxu0
      %v554 = vadd.f32 0.0, %v553
      %v555 = vpop.f32.mrb[0].mxu0
      %556 = vmatprep.mubr.bf16.mxu0 0
      %557 = vmatmul.mubr.bf16.gmra.mrb[0].mxu0 %v453
      %v558 = vpop.f32.mrb[0].mxu0
      %v559 = vadd.f32 0.0, %v558
      %v560 = vpop.f32.mrb[0].mxu0
      %v561 = vpop.f32.mrb[0].mxu0
      %v562 = vadd.f32 0.0, %v561
      %v563 = vpop.f32.mrb[0].mxu0
      %564 = vmatprep.mubr.bf16.mxu0 0
      %565 = vmatmul.mubr.bf16.gmra.mrb[0].mxu0 %v454
      %v566 = vpop.f32.mrb[0].mxu0
      %v567 = vadd.f32 0.0, %v566
      %v568 = vpop.f32.mrb[0].mxu0
      %v569 = vpop.f32.mrb[0].mxu0
      %v570 = vadd.f32 0.0, %v569
      %v571 = vpop.f32.mrb[0].mxu0
      %572 = vmatprep.mubr.bf16.mxu0 0
      %573 = vmatmul.mubr.bf16.gmra.mrb[0].mxu0 %v455
      %v574 = vpop.f32.mrb[0].mxu0
      %v575 = vadd.f32 0.0, %v574
      %v576 = vpop.f32.mrb[0].mxu0
      %v577 = vpop.f32.mrb[0].mxu0
      %v578 = vadd.f32 0.0, %v577
      %v579 = vpop.f32.mrb[0].mxu0
      %580 = vmatprep.mubr.bf16.mxu0 0
      %581 = vmatmul.mubr.bf16.gmra.mrb[0].mxu0 %v456
      %v582 = vpop.f32.mrb[0].mxu0
      %v583 = vadd.f32 0.0, %v582
      %v584 = vpop.f32.mrb[0].mxu0
      %v585 = vpop.f32.mrb[0].mxu0
      %v586 = vadd.f32 0.0, %v585
      %v587 = vpop.f32.mrb[0].mxu0
      %588 = vmatprep.mubr.bf16.mxu0 0
      %589 = vmatmul.mubr.bf16.gmra.mrb[0].mxu0 %v457
      %v590 = vpop.f32.mrb[0].mxu0
      %v591 = vadd.f32 0.0, %v590
      %v592 = vpop.f32.mrb[0].mxu0
      %v593 = vpop.f32.mrb[0].mxu0
      %v594 = vadd.f32 0.0, %v593
      %v595 = vpop.f32.mrb[0].mxu0
      %596 = vmatprep.mubr.bf16.mxu0 0
      %597 = vmatmul.mubr.bf16.gmra.mrb[0].mxu0 %v458
      %v598 = vpop.f32.mrb[0].mxu0
      %v599 = vadd.f32 0.0, %v598
      %v600 = vpop.f32.mrb[0].mxu0
      %v601 = vpop.f32.mrb[0].mxu0
      %v602 = vadd.f32 0.0, %v601
      %v603 = vpop.f32.mrb[0].mxu0
      %604 = vmatprep.mubr.bf16.mxu0 0
      %605 = vmatmul.mubr.bf16.gmra.mrb[0].mxu0 %v459
      %v606 = vpop.f32.mrb[0].mxu0
      %v607 = vadd.f32 0.0, %v606
      %v608 = vpop.f32.mrb[0].mxu0
      %v609 = vpop.f32.mrb[0].mxu0
      %v610 = vadd.f32 0.0, %v609
      %v611 = vpop.f32.mrb[0].mxu0
      %612 = vdwg.mxu0
      %v613 = vld [vmem:[#allocation2] sm:$0xff]
      %v614 = vld [vmem:[#allocation2 + $0x8] sm:$0xff]
      %v615 = vld [vmem:[#allocation2 + $0x10] sm:$0xff]
      %v616 = vld [vmem:[#allocation2 + $0x18] sm:$0xff]
      %v617 = vld [vmem:[#allocation2 + $0x20] sm:$0xff]
      %v618 = vld [vmem:[#allocation2 + $0x28] sm:$0xff]
      %v619 = vld [vmem:[#allocation2 + $0x30] sm:$0xff]
      %v620 = vld [vmem:[#allocation2 + $0x38] sm:$0xff]
      %v621 = vld [vmem:[#allocation2 + $0x40] sm:$0xff]
      %v622 = vld [vmem:[#allocation2 + $0x48] sm:$0xff]
      %v623 = vld [vmem:[#allocation2 + $0x50] sm:$0xff]
      %v624 = vld [vmem:[#allocation2 + $0x58] sm:$0xff]
      %v625 = vld [vmem:[#allocation2 + $0x60] sm:$0xff]
      %v626 = vld [vmem:[#allocation2 + $0x68] sm:$0xff]
      %v627 = vld [vmem:[#allocation2 + $0x70] sm:$0xff]
      %v628 = vld [vmem:[#allocation2 + $0x78] sm:$0xff]
      %v629 = vadd.f32 %v613, %v551
      %v630 = vadd.f32 %v614, %v554
      %v631 = vadd.f32 %v615, %v559
      %v632 = vadd.f32 %v616, %v562
      %v633 = vadd.f32 %v617, %v567
      %v634 = vadd.f32 %v618, %v570
      %v635 = vadd.f32 %v619, %v575
      %v636 = vadd.f32 %v620, %v578
      %v637 = vadd.f32 %v621, %v583
      %v638 = vadd.f32 %v622, %v586
      %v639 = vadd.f32 %v623, %v591
      %v640 = vadd.f32 %v624, %v594
      %v641 = vadd.f32 %v625, %v599
      %v642 = vadd.f32 %v626, %v602
      %v643 = vadd.f32 %v627, %v607
      %v644 = vadd.f32 %v628, %v610
      %v645 = vld [vmem:[#allocation8] sm:$0x1]
      %v647 = vlaneseq
      %v648 = vshrl.u32 %v647, 7
      %v649 = vsub.s32 0, %v648
      %v650 = vrot.slane %v645, %v649
      %v652 = vadd.f32 %v629, %v650
      %v653 = vadd.f32 %v630, %v650
      %v654 = vadd.f32 %v631, %v650
      %v655 = vadd.f32 %v632, %v650
      %v656 = vadd.f32 %v633, %v650
      %v657 = vadd.f32 %v634, %v650
      %v658 = vadd.f32 %v635, %v650
      %v659 = vadd.f32 %v636, %v650
      %v660 = vadd.f32 %v637, %v650
      %v661 = vadd.f32 %v638, %v650
      %v662 = vadd.f32 %v639, %v650
      %v663 = vadd.f32 %v640, %v650
      %v664 = vadd.f32 %v641, %v650
      %v665 = vadd.f32 %v642, %v650
      %v666 = vadd.f32 %v643, %v650
      %v667 = vadd.f32 %v644, %v650
      %v668 = vmax.f32 %v652, 0.0
      %v669 = vmax.f32 %v653, 0.0
      %v670 = vmax.f32 %v654, 0.0
      %v671 = vmax.f32 %v655, 0.0
      %v672 = vmax.f32 %v656, 0.0
      %v673 = vmax.f32 %v657, 0.0
      %v674 = vmax.f32 %v658, 0.0
      %v675 = vmax.f32 %v659, 0.0
      %v676 = vmax.f32 %v660, 0.0
      %v677 = vmax.f32 %v661, 0.0
      %v678 = vmax.f32 %v662, 0.0
      %v679 = vmax.f32 %v663, 0.0
      %v680 = vmax.f32 %v664, 0.0
      %v681 = vmax.f32 %v665, 0.0
      %v682 = vmax.f32 %v666, 0.0
      %v683 = vmax.f32 %v667, 0.0
      %684 = vst [vmem:[#allocation12] sm:$0xff] %v668
      %685 = vst [vmem:[#allocation12 + $0x8] sm:$0xff] %v669
      %686 = vst [vmem:[#allocation12 + $0x10] sm:$0xff] %v670
      %687 = vst [vmem:[#allocation12 + $0x18] sm:$0xff] %v671
      %688 = vst [vmem:[#allocation12 + $0x20] sm:$0xff] %v672
      %689 = vst [vmem:[#allocation12 + $0x28] sm:$0xff] %v673
      %690 = vst [vmem:[#allocation12 + $0x30] sm:$0xff] %v674
      %691 = vst [vmem:[#allocation12 + $0x38] sm:$0xff] %v675
      %692 = vst [vmem:[#allocation12 + $0x40] sm:$0xff] %v676
      %693 = vst [vmem:[#allocation12 + $0x48] sm:$0xff] %v677
      %694 = vst [vmem:[#allocation12 + $0x50] sm:$0xff] %v678
      %695 = vst [vmem:[#allocation12 + $0x58] sm:$0xff] %v679
      %696 = vst [vmem:[#allocation12 + $0x60] sm:$0xff] %v680
      %697 = vst [vmem:[#allocation12 + $0x68] sm:$0xff] %v681
      %698 = vst [vmem:[#allocation12 + $0x70] sm:$0xff] %v682
      %699 = vst [vmem:[#allocation12 + $0x78] sm:$0xff] %v683
    $region53: #{_block_forward.3} parent=1 // pred_fallthru
      _
    // Predicated region
    $region54: #{_block_forward.3} parent=1 // pred_check
      _
    $region55: #{_block_forward.3} parent=1 // pred_check_branch
      %701 = sbr.rel (0) target = $region57
    $region56: #{_block_forward.3} parent=1 // pred_region
      %s703 = ssub.s32 2048, 2048
      %704 = vsyncadd [#allocation5], %s703
      %s705 = sshll.u32 [#allocation12], 4
      %s706 = int_to_ptr.vmem [resolvable:$true] %s705
      %711 = dma.vmem_to_hbm [thread:$0]  %s706, 2048, %s5, [#allocation5], 128, 128, 8
    $region57: #{_block_forward.3} parent=1 // pred_fallthru
      _
    // Predicated region
    $region58: #{_block_forward.3} parent=1 // pred_check
      _
    $region59: #{_block_forward.3} parent=1 // pred_check_branch
      %713 = sbr.rel (0) target = $region61
    $region60: #{_block_forward.3} parent=1 // pred_region
      %714 = dma.done [#allocation5], 2048
    $region61: #{_block_forward.3} parent=1 // pred_fallthru
      _
    %715 = vsyncpa [#allocation4], 1
    %716 = vsyncpa [#allocation7], 1
    %717 = vsyncpa [#allocation10], 1
    %718 = vsyncpa [#allocation5], 1

</llo_original>
